<compile_context>
chip_gen: v6e
topology: v6e:2x2x1
jax: 0.10.0
libtpu: 0.0.40
codegen_flags: <defaults>
</compile_context>

<pallas_src>
import jax
import jax.numpy as jnp
from jax.experimental import pallas as pl
from jax.experimental.pallas import tpu as pltpu

NEG_SLOPE = 0.01  # nn.LeakyReLU default


def _lrelu(v):
    return jnp.where(v > 0, v, NEG_SLOPE * v)


def rb_kernel(x_ref, su_ref, sd_ref, bw1_ref, b1_ref, bw2_ref, b2_ref,
              pool_ref, bcast_ref, sw1_ref, sw2_ref, o_ref):
    bb, Hs, L = x_ref.shape            # slab rows per image = Hs, lane width = L
    C = sw1_ref.shape[0]
    M = bb * Hs
    inv_hw = 1.0 / float(Hs * (L // C))   # = 1 / (H * W)

    x3 = x_ref[...].astype(jnp.float32)   # (bb, Hs, L)
    x2 = x3.reshape(M, L)                 # free leading-dim merge
    s_up = su_ref[...]                    # (M, M): slab row p -> p-1 (same image, else 0)
    s_dn = sd_ref[...]                    # (M, M): slab row p -> p+1 (same image, else 0)

    def conv3x3(z, bw_ref, b_ref):
        # Cross-slab-row kh taps (incl. top/bottom zero padding) on the idle MXU.
        up = jnp.dot(s_up, z, preferred_element_type=jnp.float32)
        dn = jnp.dot(s_dn, z, preferred_element_type=jnp.float32)
        # Accumulator initialised with the lane-tiled bias.
        acc = jnp.broadcast_to(b_ref[...], (M, L)).astype(jnp.float32)
        acc = acc + jnp.dot(up, bw_ref[0], preferred_element_type=jnp.float32)
        acc = acc + jnp.dot(z,  bw_ref[1], preferred_element_type=jnp.float32)
        acc = acc + jnp.dot(dn, bw_ref[2], preferred_element_type=jnp.float32)
        return _lrelu(acc)

    # module_body: conv -> LeakyReLU -> conv -> LeakyReLU
    r = conv3x3(x2, bw1_ref, b1_ref)
    r = conv3x3(r, bw2_ref, b2_ref)

    # SELayer (reduction = 1): two-stage global average pool, then two FCs.
    r3 = r.reshape(bb, Hs, L)
    row_sum = jnp.sum(r3, axis=1)                                            # (bb, L)
    pooled = jnp.dot(row_sum, pool_ref[...],
                     preferred_element_type=jnp.float32) * inv_hw            # (bb, C)
    y = _lrelu(jnp.dot(pooled, sw1_ref[...], preferred_element_type=jnp.float32))
    y = _lrelu(jnp.dot(y, sw2_ref[...], preferred_element_type=jnp.float32))
    scale = jnp.dot(y, bcast_ref[...], preferred_element_type=jnp.float32)   # (bb, L)

    out = r3 * scale[:, None, :] + x3                                        # residual add
    o_ref[...] = out.astype(o_ref.dtype)


def _merged_band_weight(w_hwio, W, F):
    """HWIO (3,3,C,C) -> (3, L, L), L = F*W*C.

    Index 0/1/2 of the leading axis correspond to the input slab row
    p-1 / p / p+1.  kw taps, W-boundary zero padding and the intra-slab-row
    kh taps are all folded into the band."""
    C = w_hwio.shape[-1]
    WC = W * C
    L = F * WC
    mats = []
    for dp in (-1, 0, 1):
        m = jnp.zeros((L, L), jnp.float32)
        for q_out in range(F):
            for q_in in range(F):
                kh = q_in - q_out + 1 + F * dp
                if 0 <= kh <= 2:
                    blk = jnp.zeros((WC, WC), jnp.float32)
                    for kw in range(3):
                        # out at w_out reads input at w_in = w_out + kw - 1
                        band = jnp.eye(W, W, k=1 - kw, dtype=jnp.float32)
                        blk = blk + jnp.kron(band, w_hwio[kh, kw].astype(jnp.float32))
                    m = m.at[q_in * WC:(q_in + 1) * WC,
                             q_out * WC:(q_out + 1) * WC].set(blk)
        mats.append(m)
    return jnp.stack(mats, axis=0)


def _row_shift_mats(bb, hs):
    """(M,M) matrices selecting slab row p-1 / p+1 within each image, zero at borders."""
    m = bb * hs
    r = jnp.arange(m)
    hh = r % hs
    s_up = ((r[:, None] - 1 == r[None, :]) & (hh[:, None] >= 1)).astype(jnp.float32)
    s_dn = ((r[:, None] + 1 == r[None, :]) & (hh[:, None] <= hs - 2)).astype(jnp.float32)
    return s_up, s_dn


def rb_forward_nhwc(x, w1, b1, w2, b2, sw1, sw2):
    B, H, W, C = x.shape
    WC = W * C

    # Merge F consecutive H-rows into the lane axis until lanes reach 128.
    F = 1
    while WC * F < 128 and H % (F * 2) == 0:
        F *= 2
    Hs = H // F
    L = F * WC

    # Fold several images into each grid step (whole batch at this size).
    bb = B if B <= 8 else (8 if B % 8 == 0 else 1)
    M = bb * Hs

    # Weight / shape-only preprocessing (one-time per weight set).
    bw1 = _merged_band_weight(w1, W, F)
    bw2 = _merged_band_weight(w2, W, F)
    b1r = jnp.tile(b1.reshape(1, C).astype(jnp.float32), (1, F * W))   # (1, L)
    b2r = jnp.tile(b2.reshape(1, C).astype(jnp.float32), (1, F * W))
    s_up, s_dn = _row_shift_mats(bb, Hs)
    pool = jnp.tile(jnp.eye(C, dtype=jnp.float32), (F * W, 1))         # (L, C): fold lane groups
    bcast = pool.T                                                     # (C, L): channel -> lanes

    xr = x.reshape(B, Hs, L)                                           # lane-dense layout (free)

    def full(shape):
        return pl.BlockSpec(shape, lambda i: (0,) * len(shape))

    out = pl.pallas_call(
        rb_kernel,
        out_shape=jax.ShapeDtypeStruct((B, Hs, L), x.dtype),
        grid_spec=pltpu.PrefetchScalarGridSpec(
            num_scalar_prefetch=0,
            grid=(B // bb,),
            in_specs=[
                pl.BlockSpec((bb, Hs, L), lambda i: (i, 0, 0)),  # x
                full((M, M)),       # slab-row shift up
                full((M, M)),       # slab-row shift down
                full((3, L, L)),    # conv1 banded weights
                full((1, L)),       # conv1 bias (lane-tiled)
                full((3, L, L)),    # conv2 banded weights
                full((1, L)),       # conv2 bias
                full((L, C)),       # pool fold (L -> C)
                full((C, L)),       # broadcast back (C -> L)
                full((C, C)),       # SE fc1 (in, out)
                full((C, C)),       # SE fc2 (in, out)
            ],
            out_specs=pl.BlockSpec((bb, Hs, L), lambda i: (i, 0, 0)),
        ),
        compiler_params=pltpu.CompilerParams(
            dimension_semantics=("parallel",)),   # batch-parallel across TCs when grid > 1
        input_output_aliases={0: 0},              # write result over the x buffer
    )(xr, s_up, s_dn, bw1, b1r, bw2, b2r, pool, bcast, sw1, sw2)

    return out.reshape(B, H, W, C)


@jax.jit
def rb_forward_nchw(x_nchw, params):
    """PyTorch-compatible entry point (NCHW in / NCHW out)."""
    w1, b1, w2, b2, sw1, sw2 = params
    x = jnp.transpose(x_nchw, (0, 2, 3, 1))       # NCHW -> NHWC
    y = rb_forward_nhwc(x, w1, b1, w2, b2, sw1, sw2)
    return jnp.transpose(y, (0, 3, 1, 2))         # NHWC -> NCHW


def ref_rb_nhwc(x, w1, b1, w2, b2, sw1, sw2):
    """Pure-JAX reference (NHWC) for correctness checking."""
    dn = jax.lax.conv_dimension_numbers(x.shape, w1.shape, ('NHWC', 'HWIO', 'NHWC'))
    r = _lrelu(jax.lax.conv_general_dilated(x, w1, (1, 1), 'SAME',
                                            dimension_numbers=dn)
               + b1.reshape(1, 1, 1, -1))
    r = _lrelu(jax.lax.conv_general_dilated(r, w2, (1, 1), 'SAME',
                                            dimension_numbers=dn)
               + b2.reshape(1, 1, 1, -1))
    y = jnp.mean(r, axis=(1, 2))          # (B, C)
    y = _lrelu(y @ sw1)
    y = _lrelu(y @ sw2)
    return r * y[:, None, None, :] + x


if __name__ == "__main__":
    B, C, H, W = 2, 4, 16, 16   # n_feats = 4

    key = jax.random.PRNGKey(0)
    k = jax.random.split(key, 7)
    scale = 0.1
    x_nchw = jax.random.normal(k[0], (B, C, H, W), jnp.float32)
    w1 = scale * jax.random.normal(k[1], (3, 3, C, C), jnp.float32)   # HWIO
    b1 = scale * jax.random.normal(k[2], (1, C), jnp.float32)
    w2 = scale * jax.random.normal(k[3], (3, 3, C, C), jnp.float32)
    b2 = scale * jax.random.normal(k[4], (1, C), jnp.float32)
    sw1 = scale * jax.random.normal(k[5], (C, C), jnp.float32)        # (in, out)
    sw2 = scale * jax.random.normal(k[6], (C, C), jnp.float32)

    params = (w1, b1, w2, b2, sw1, sw2)

    out = rb_forward_nchw(x_nchw, params)
    out = jax.block_until_ready(out)

    # correctness check against pure-JAX reference
    x_nhwc = jnp.transpose(x_nchw, (0, 2, 3, 1))
    ref = ref_rb_nhwc(x_nhwc, *params)
    ref_nchw = jnp.transpose(ref, (0, 3, 1, 2))
    assert out.shape == x_nchw.shape and out.dtype == x_nchw.dtype
    assert jnp.allclose(out, ref_nchw, atol=1e-4, rtol=1e-4), "mismatch vs reference"

    print("KERNEL_OK")
</pallas_src>

<mosaic_0001>
module attributes {stable_mosaic.version = 11 : i64} {
  func.func @rb_kernel(%arg0: i32, %arg1: memref<2x8x128xf32, #tpu.memory_space<vmem>>, %arg2: memref<16x16xf32, #tpu.memory_space<vmem>>, %arg3: memref<16x16xf32, #tpu.memory_space<vmem>>, %arg4: memref<3x128x128xf32, #tpu.memory_space<vmem>>, %arg5: memref<1x128xf32, #tpu.memory_space<vmem>>, %arg6: memref<3x128x128xf32, #tpu.memory_space<vmem>>, %arg7: memref<1x128xf32, #tpu.memory_space<vmem>>, %arg8: memref<128x4xf32, #tpu.memory_space<vmem>>, %arg9: memref<4x128xf32, #tpu.memory_space<vmem>>, %arg10: memref<4x4xf32, #tpu.memory_space<vmem>>, %arg11: memref<4x4xf32, #tpu.memory_space<vmem>>, %arg12: memref<2x8x128xf32, #tpu.memory_space<vmem>>) attributes {dimension_semantics = [#tpu.dimension_semantics<parallel>], iteration_bounds = array<i64: 1>, scalar_prefetch = 0 : i64, scratch_operands = 0 : i64, tpu.core_type = #tpu.core_type<tc>, window_params = [{transform_indices = @transform_0, window_bounds = array<i64: 2, 8, 128>}, {pipeline_mode = #tpu.pipeline_mode<synchronous>, transform_indices = @transform_1, window_bounds = array<i64: 16, 16>}, {pipeline_mode = #tpu.pipeline_mode<synchronous>, transform_indices = @transform_2, window_bounds = array<i64: 16, 16>}, {pipeline_mode = #tpu.pipeline_mode<synchronous>, transform_indices = @transform_3, window_bounds = array<i64: 3, 128, 128>}, {pipeline_mode = #tpu.pipeline_mode<synchronous>, transform_indices = @transform_4, window_bounds = array<i64: 1, 128>}, {pipeline_mode = #tpu.pipeline_mode<synchronous>, transform_indices = @transform_5, window_bounds = array<i64: 3, 128, 128>}, {pipeline_mode = #tpu.pipeline_mode<synchronous>, transform_indices = @transform_6, window_bounds = array<i64: 1, 128>}, {pipeline_mode = #tpu.pipeline_mode<synchronous>, transform_indices = @transform_7, window_bounds = array<i64: 128, 4>}, {pipeline_mode = #tpu.pipeline_mode<synchronous>, transform_indices = @transform_8, window_bounds = array<i64: 4, 128>}, {pipeline_mode = #tpu.pipeline_mode<synchronous>, transform_indices = @transform_9, window_bounds = array<i64: 4, 4>}, {pipeline_mode = #tpu.pipeline_mode<synchronous>, transform_indices = @transform_10, window_bounds = array<i64: 4, 4>}, {transform_indices = @transform_11, window_bounds = array<i64: 2, 8, 128>}]} {
    %c0 = arith.constant 0 : index
    %c0_0 = arith.constant 0 : index
    %c0_1 = arith.constant 0 : index
    %0 = vector.load %arg1[%c0, %c0_0, %c0_1] : memref<2x8x128xf32, #tpu.memory_space<vmem>>, vector<2x8x128xf32>
    %1 = vector.shape_cast %0 : vector<2x8x128xf32> to vector<16x128xf32>
    %c0_2 = arith.constant 0 : index
    %c0_3 = arith.constant 0 : index
    %2 = vector.load %arg2[%c0_2, %c0_3] : memref<16x16xf32, #tpu.memory_space<vmem>>, vector<16x16xf32>
    %c0_4 = arith.constant 0 : index
    %c0_5 = arith.constant 0 : index
    %3 = vector.load %arg3[%c0_4, %c0_5] : memref<16x16xf32, #tpu.memory_space<vmem>>, vector<16x16xf32>
    %cst = arith.constant dense<0.000000e+00> : vector<16x128xf32>
    %4 = tpu.matmul %2, %1, %cst {dimension_numbers = #tpu.dot_dimension_numbers<[1], [0], [0], [1], [0, 0, 1, 1], [], []>} : vector<16x16xf32>, vector<16x128xf32>, vector<16x128xf32> -> vector<16x128xf32>
    %cst_6 = arith.constant dense<0.000000e+00> : vector<16x128xf32>
    %5 = tpu.matmul %3, %1, %cst_6 {dimension_numbers = #tpu.dot_dimension_numbers<[1], [0], [0], [1], [0, 0, 1, 1], [], []>} : vector<16x16xf32>, vector<16x128xf32>, vector<16x128xf32> -> vector<16x128xf32>
    %c0_7 = arith.constant 0 : index
    %c0_8 = arith.constant 0 : index
    %6 = vector.load %arg5[%c0_7, %c0_8] : memref<1x128xf32, #tpu.memory_space<vmem>>, vector<1x128xf32>
    %7 = vector.shape_cast %6 : vector<1x128xf32> to vector<1x128xf32>
    %8 = vector.broadcast %7 : vector<1x128xf32> to vector<16x128xf32>
    %c0_9 = arith.constant 0 : index
    %c0_10 = arith.constant 0 : index
    %c0_11 = arith.constant 0 : index
    %9 = vector.load %arg4[%c0_9, %c0_10, %c0_11] : memref<3x128x128xf32, #tpu.memory_space<vmem>>, vector<1x128x128xf32>
    %10 = vector.shape_cast %9 : vector<1x128x128xf32> to vector<128x128xf32>
    %cst_12 = arith.constant dense<0.000000e+00> : vector<16x128xf32>
    %11 = tpu.matmul %4, %10, %cst_12 {dimension_numbers = #tpu.dot_dimension_numbers<[1], [0], [0], [1], [0, 0, 1, 1], [], []>} : vector<16x128xf32>, vector<128x128xf32>, vector<16x128xf32> -> vector<16x128xf32>
    %12 = arith.addf %8, %11 : vector<16x128xf32>
    %c1 = arith.constant 1 : index
    %c0_13 = arith.constant 0 : index
    %c0_14 = arith.constant 0 : index
    %13 = vector.load %arg4[%c1, %c0_13, %c0_14] : memref<3x128x128xf32, #tpu.memory_space<vmem>>, vector<1x128x128xf32>
    %14 = vector.shape_cast %13 : vector<1x128x128xf32> to vector<128x128xf32>
    %cst_15 = arith.constant dense<0.000000e+00> : vector<16x128xf32>
    %15 = tpu.matmul %1, %14, %cst_15 {dimension_numbers = #tpu.dot_dimension_numbers<[1], [0], [0], [1], [0, 0, 1, 1], [], []>} : vector<16x128xf32>, vector<128x128xf32>, vector<16x128xf32> -> vector<16x128xf32>
    %16 = arith.addf %12, %15 : vector<16x128xf32>
    %c2 = arith.constant 2 : index
    %c0_16 = arith.constant 0 : index
    %c0_17 = arith.constant 0 : index
    %17 = vector.load %arg4[%c2, %c0_16, %c0_17] : memref<3x128x128xf32, #tpu.memory_space<vmem>>, vector<1x128x128xf32>
    %18 = vector.shape_cast %17 : vector<1x128x128xf32> to vector<128x128xf32>
    %cst_18 = arith.constant dense<0.000000e+00> : vector<16x128xf32>
    %19 = tpu.matmul %5, %18, %cst_18 {dimension_numbers = #tpu.dot_dimension_numbers<[1], [0], [0], [1], [0, 0, 1, 1], [], []>} : vector<16x128xf32>, vector<128x128xf32>, vector<16x128xf32> -> vector<16x128xf32>
    %20 = arith.addf %16, %19 : vector<16x128xf32>
    %cst_19 = arith.constant 0.000000e+00 : f32
    %21 = vector.broadcast %cst_19 : f32 to vector<16x128xf32>
    %22 = arith.cmpf ogt, %20, %21 : vector<16x128xf32>
    %cst_20 = arith.constant 0.00999999977 : f32
    %23 = vector.broadcast %cst_20 : f32 to vector<16x128xf32>
    %24 = arith.mulf %23, %20 : vector<16x128xf32>
    %25 = arith.select %22, %20, %24 : vector<16x128xi1>, vector<16x128xf32>
    %cst_21 = arith.constant dense<0.000000e+00> : vector<16x128xf32>
    %26 = tpu.matmul %2, %25, %cst_21 {dimension_numbers = #tpu.dot_dimension_numbers<[1], [0], [0], [1], [0, 0, 1, 1], [], []>} : vector<16x16xf32>, vector<16x128xf32>, vector<16x128xf32> -> vector<16x128xf32>
    %cst_22 = arith.constant dense<0.000000e+00> : vector<16x128xf32>
    %27 = tpu.matmul %3, %25, %cst_22 {dimension_numbers = #tpu.dot_dimension_numbers<[1], [0], [0], [1], [0, 0, 1, 1], [], []>} : vector<16x16xf32>, vector<16x128xf32>, vector<16x128xf32> -> vector<16x128xf32>
    %c0_23 = arith.constant 0 : index
    %c0_24 = arith.constant 0 : index
    %28 = vector.load %arg7[%c0_23, %c0_24] : memref<1x128xf32, #tpu.memory_space<vmem>>, vector<1x128xf32>
    %29 = vector.shape_cast %28 : vector<1x128xf32> to vector<1x128xf32>
    %30 = vector.broadcast %29 : vector<1x128xf32> to vector<16x128xf32>
    %c0_25 = arith.constant 0 : index
    %c0_26 = arith.constant 0 : index
    %c0_27 = arith.constant 0 : index
    %31 = vector.load %arg6[%c0_25, %c0_26, %c0_27] : memref<3x128x128xf32, #tpu.memory_space<vmem>>, vector<1x128x128xf32>
    %32 = vector.shape_cast %31 : vector<1x128x128xf32> to vector<128x128xf32>
    %cst_28 = arith.constant dense<0.000000e+00> : vector<16x128xf32>
    %33 = tpu.matmul %26, %32, %cst_28 {dimension_numbers = #tpu.dot_dimension_numbers<[1], [0], [0], [1], [0, 0, 1, 1], [], []>} : vector<16x128xf32>, vector<128x128xf32>, vector<16x128xf32> -> vector<16x128xf32>
    %34 = arith.addf %30, %33 : vector<16x128xf32>
    %c1_29 = arith.constant 1 : index
    %c0_30 = arith.constant 0 : index
    %c0_31 = arith.constant 0 : index
    %35 = vector.load %arg6[%c1_29, %c0_30, %c0_31] : memref<3x128x128xf32, #tpu.memory_space<vmem>>, vector<1x128x128xf32>
    %36 = vector.shape_cast %35 : vector<1x128x128xf32> to vector<128x128xf32>
    %cst_32 = arith.constant dense<0.000000e+00> : vector<16x128xf32>
    %37 = tpu.matmul %25, %36, %cst_32 {dimension_numbers = #tpu.dot_dimension_numbers<[1], [0], [0], [1], [0, 0, 1, 1], [], []>} : vector<16x128xf32>, vector<128x128xf32>, vector<16x128xf32> -> vector<16x128xf32>
    %38 = arith.addf %34, %37 : vector<16x128xf32>
    %c2_33 = arith.constant 2 : index
    %c0_34 = arith.constant 0 : index
    %c0_35 = arith.constant 0 : index
    %39 = vector.load %arg6[%c2_33, %c0_34, %c0_35] : memref<3x128x128xf32, #tpu.memory_space<vmem>>, vector<1x128x128xf32>
    %40 = vector.shape_cast %39 : vector<1x128x128xf32> to vector<128x128xf32>
    %cst_36 = arith.constant dense<0.000000e+00> : vector<16x128xf32>
    %41 = tpu.matmul %27, %40, %cst_36 {dimension_numbers = #tpu.dot_dimension_numbers<[1], [0], [0], [1], [0, 0, 1, 1], [], []>} : vector<16x128xf32>, vector<128x128xf32>, vector<16x128xf32> -> vector<16x128xf32>
    %42 = arith.addf %38, %41 : vector<16x128xf32>
    %cst_37 = arith.constant 0.000000e+00 : f32
    %43 = vector.broadcast %cst_37 : f32 to vector<16x128xf32>
    %44 = arith.cmpf ogt, %42, %43 : vector<16x128xf32>
    %cst_38 = arith.constant 0.00999999977 : f32
    %45 = vector.broadcast %cst_38 : f32 to vector<16x128xf32>
    %46 = arith.mulf %45, %42 : vector<16x128xf32>
    %47 = arith.select %44, %42, %46 : vector<16x128xi1>, vector<16x128xf32>
    %48 = vector.shape_cast %47 : vector<16x128xf32> to vector<2x8x128xf32>
    %cst_39 = arith.constant dense<0.000000e+00> : vector<2x128xf32>
    %49 = vector.multi_reduction <add>, %48, %cst_39 [1] : vector<2x8x128xf32> to vector<2x128xf32>
    %c0_40 = arith.constant 0 : index
    %c0_41 = arith.constant 0 : index
    %50 = vector.load %arg8[%c0_40, %c0_41] : memref<128x4xf32, #tpu.memory_space<vmem>>, vector<128x4xf32>
    %cst_42 = arith.constant dense<0.000000e+00> : vector<2x4xf32>
    %51 = tpu.matmul %49, %50, %cst_42 {dimension_numbers = #tpu.dot_dimension_numbers<[1], [0], [0], [1], [0, 0, 1, 1], [], []>} : vector<2x128xf32>, vector<128x4xf32>, vector<2x4xf32> -> vector<2x4xf32>
    %cst_43 = arith.constant 3.906250e-03 : f32
    %52 = vector.broadcast %cst_43 : f32 to vector<2x4xf32>
    %53 = arith.mulf %51, %52 : vector<2x4xf32>
    %c0_44 = arith.constant 0 : index
    %c0_45 = arith.constant 0 : index
    %54 = vector.load %arg10[%c0_44, %c0_45] : memref<4x4xf32, #tpu.memory_space<vmem>>, vector<4x4xf32>
    %cst_46 = arith.constant dense<0.000000e+00> : vector<2x4xf32>
    %55 = tpu.matmul %53, %54, %cst_46 {dimension_numbers = #tpu.dot_dimension_numbers<[1], [0], [0], [1], [0, 0, 1, 1], [], []>} : vector<2x4xf32>, vector<4x4xf32>, vector<2x4xf32> -> vector<2x4xf32>
    %cst_47 = arith.constant 0.000000e+00 : f32
    %56 = vector.broadcast %cst_47 : f32 to vector<2x4xf32>
    %57 = arith.cmpf ogt, %55, %56 : vector<2x4xf32>
    %cst_48 = arith.constant 0.00999999977 : f32
    %58 = vector.broadcast %cst_48 : f32 to vector<2x4xf32>
    %59 = arith.mulf %58, %55 : vector<2x4xf32>
    %60 = arith.select %57, %55, %59 : vector<2x4xi1>, vector<2x4xf32>
    %c0_49 = arith.constant 0 : index
    %c0_50 = arith.constant 0 : index
    %61 = vector.load %arg11[%c0_49, %c0_50] : memref<4x4xf32, #tpu.memory_space<vmem>>, vector<4x4xf32>
    %cst_51 = arith.constant dense<0.000000e+00> : vector<2x4xf32>
    %62 = tpu.matmul %60, %61, %cst_51 {dimension_numbers = #tpu.dot_dimension_numbers<[1], [0], [0], [1], [0, 0, 1, 1], [], []>} : vector<2x4xf32>, vector<4x4xf32>, vector<2x4xf32> -> vector<2x4xf32>
    %cst_52 = arith.constant 0.000000e+00 : f32
    %63 = vector.broadcast %cst_52 : f32 to vector<2x4xf32>
    %64 = arith.cmpf ogt, %62, %63 : vector<2x4xf32>
    %cst_53 = arith.constant 0.00999999977 : f32
    %65 = vector.broadcast %cst_53 : f32 to vector<2x4xf32>
    %66 = arith.mulf %65, %62 : vector<2x4xf32>
    %67 = arith.select %64, %62, %66 : vector<2x4xi1>, vector<2x4xf32>
    %c0_54 = arith.constant 0 : index
    %c0_55 = arith.constant 0 : index
    %68 = vector.load %arg9[%c0_54, %c0_55] : memref<4x128xf32, #tpu.memory_space<vmem>>, vector<4x128xf32>
    %cst_56 = arith.constant dense<0.000000e+00> : vector<2x128xf32>
    %69 = tpu.matmul %67, %68, %cst_56 {dimension_numbers = #tpu.dot_dimension_numbers<[1], [0], [0], [1], [0, 0, 1, 1], [], []>} : vector<2x4xf32>, vector<4x128xf32>, vector<2x128xf32> -> vector<2x128xf32>
    %70 = vector.shape_cast %69 : vector<2x128xf32> to vector<2x1x128xf32>
    %71 = vector.broadcast %70 : vector<2x1x128xf32> to vector<2x8x128xf32>
    %72 = arith.mulf %48, %71 : vector<2x8x128xf32>
    %73 = arith.addf %72, %0 : vector<2x8x128xf32>
    %c0_57 = arith.constant 0 : index
    %c0_58 = arith.constant 0 : index
    %c0_59 = arith.constant 0 : index
    %74 = vector.load %arg12[%c0_57, %c0_58, %c0_59] : memref<2x8x128xf32, #tpu.memory_space<vmem>>, vector<2x8x128xf32>
    tpu.vector_store %arg12[%c0_57, %c0_58, %c0_59], %73 {strides = array<i32>} : memref<2x8x128xf32, #tpu.memory_space<vmem>>, vector<2x8x128xf32>,
    return
  }
  func.func @transform_0(%arg0: i32) -> (i32, i32, i32) {
    %c0_i32 = arith.constant 0 : i32
    %c0_i32_0 = arith.constant 0 : i32
    %c0_i32_1 = arith.constant 0 : i32
    return %arg0, %c0_i32, %c0_i32_0 : i32, i32, i32
  }
  func.func @transform_1(%arg0: i32) -> (i32, i32) {
    %c0_i32 = arith.constant 0 : i32
    %c0_i32_0 = arith.constant 0 : i32
    %c0_i32_1 = arith.constant 0 : i32
    return %c0_i32, %c0_i32_0 : i32, i32
  }
  func.func @transform_2(%arg0: i32) -> (i32, i32) {
    %c0_i32 = arith.constant 0 : i32
    %c0_i32_0 = arith.constant 0 : i32
    %c0_i32_1 = arith.constant 0 : i32
    return %c0_i32, %c0_i32_0 : i32, i32
  }
  func.func @transform_3(%arg0: i32) -> (i32, i32, i32) {
    %c0_i32 = arith.constant 0 : i32
    %c0_i32_0 = arith.constant 0 : i32
    %c0_i32_1 = arith.constant 0 : i32
    %c0_i32_2 = arith.constant 0 : i32
    return %c0_i32, %c0_i32_0, %c0_i32_1 : i32, i32, i32
  }
  func.func @transform_4(%arg0: i32) -> (i32, i32) {
    %c0_i32 = arith.constant 0 : i32
    %c0_i32_0 = arith.constant 0 : i32
    %c0_i32_1 = arith.constant 0 : i32
    return %c0_i32, %c0_i32_0 : i32, i32
  }
  func.func @transform_5(%arg0: i32) -> (i32, i32, i32) {
    %c0_i32 = arith.constant 0 : i32
    %c0_i32_0 = arith.constant 0 : i32
    %c0_i32_1 = arith.constant 0 : i32
    %c0_i32_2 = arith.constant 0 : i32
    return %c0_i32, %c0_i32_0, %c0_i32_1 : i32, i32, i32
  }
  func.func @transform_6(%arg0: i32) -> (i32, i32) {
    %c0_i32 = arith.constant 0 : i32
    %c0_i32_0 = arith.constant 0 : i32
    %c0_i32_1 = arith.constant 0 : i32
    return %c0_i32, %c0_i32_0 : i32, i32
  }
  func.func @transform_7(%arg0: i32) -> (i32, i32) {
    %c0_i32 = arith.constant 0 : i32
    %c0_i32_0 = arith.constant 0 : i32
    %c0_i32_1 = arith.constant 0 : i32
    return %c0_i32, %c0_i32_0 : i32, i32
  }
  func.func @transform_8(%arg0: i32) -> (i32, i32) {
    %c0_i32 = arith.constant 0 : i32
    %c0_i32_0 = arith.constant 0 : i32
    %c0_i32_1 = arith.constant 0 : i32
    return %c0_i32, %c0_i32_0 : i32, i32
  }
  func.func @transform_9(%arg0: i32) -> (i32, i32) {
    %c0_i32 = arith.constant 0 : i32
    %c0_i32_0 = arith.constant 0 : i32
    %c0_i32_1 = arith.constant 0 : i32
    return %c0_i32, %c0_i32_0 : i32, i32
  }
  func.func @transform_10(%arg0: i32) -> (i32, i32) {
    %c0_i32 = arith.constant 0 : i32
    %c0_i32_0 = arith.constant 0 : i32
    %c0_i32_1 = arith.constant 0 : i32
    return %c0_i32, %c0_i32_0 : i32, i32
  }
  func.func @transform_11(%arg0: i32) -> (i32, i32, i32) {
    %c0_i32 = arith.constant 0 : i32
    %c0_i32_0 = arith.constant 0 : i32
    %c0_i32_1 = arith.constant 0 : i32
    return %arg0, %c0_i32, %c0_i32_0 : i32, i32, i32
  }
}

</mosaic_0001>

<llo_original>
// kernel: tile.29
$region0: #{tile.29}
  %s0 = inlined_call_operand.vmem [shape: f32[32,4,4], index: 0, kind: input, shape index: {}]
  %s1 = inlined_call_operand.vmem [shape: f32[128,4], index: 1, kind: output, shape index: {}]
  $region1: #{tile.29} parent=0
    #allocation0 [shape = 'u8[4096]{0}', space=vmem, size = 0x1000, scoped, tag = 'scoped mem for output reshape']
    %v2 = vld [vmem:[%s0] sm:$0x1]
    %s3 = scalar_lea.vmem %s0, 31
    %v4 = vld [vmem:[%s3] sm:$0x2]
    %vm5 = vcmask 1041409
    %v6 = vsel %vm5, %v4, %v2
    %s7 = scalar_lea.vmem %s0, 62
    %v8 = vld [vmem:[%s7] sm:$0x4]
    %vm9 = vcmask 1042434
    %v10 = vsel %vm9, %v8, %v6
    %s11 = scalar_lea.vmem %s0, 93
    %v12 = vld [vmem:[%s11] sm:$0x8]
    %vm13 = vcmask 1043459
    %v14 = vsel %vm13, %v12, %v10
    %vm15 = vcmask 31744
    %16 = vst.msk [vmem:[#allocation0] sm:$0xf] %vm15, %v14
    %s17 = scalar_lea.vmem %s0, 31
    %v18 = vld [vmem:[%s17] sm:$0x1]
    %s19 = scalar_lea.vmem %s0, 62
    %v20 = vld [vmem:[%s19] sm:$0x2]
    %vm21 = vcmask 1041409
    %v22 = vsel %vm21, %v20, %v18
    %s23 = scalar_lea.vmem %s0, 93
    %v24 = vld [vmem:[%s23] sm:$0x4]
    %vm25 = vcmask 1042434
    %v26 = vsel %vm25, %v24, %v22
    %s27 = scalar_lea.vmem %s0, 124
    %v28 = vld [vmem:[%s27] sm:$0x8]
    %vm29 = vcmask 1043459
    %v30 = vsel %vm29, %v28, %v26
    %31 = vrot.lane.b32.xlu0 %v30, 124
    %v32 = vpop.permute.xlu0 %31
    %vm33 = vcmask 1048544
    %34 = vst.msk [vmem:[#allocation0] sm:$0xf] %vm33, %v32
    %s35 = scalar_lea.vmem %s0, 30
    %v36 = vld [vmem:[%s35] sm:$0x1]
    %s37 = scalar_lea.vmem %s0, 61
    %v38 = vld [vmem:[%s37] sm:$0x2]
    %vm39 = vcmask 1041409
    %v40 = vsel %vm39, %v38, %v36
    %s41 = scalar_lea.vmem %s0, 92
    %v42 = vld [vmem:[%s41] sm:$0x4]
    %vm43 = vcmask 1042434
    %v44 = vsel %vm43, %v42, %v40
    %s45 = scalar_lea.vmem %s0, 123
    %v46 = vld [vmem:[%s45] sm:$0x8]
    %vm47 = vcmask 1043459
    %v48 = vsel %vm47, %v46, %v44
    %49 = vrot.lane.b32.xlu0 %v48, 120
    %v50 = vpop.permute.xlu0 %49
    %vm51 = vcmask 1015744
    %52 = vst.msk [vmem:[#allocation0] sm:$0xf] %vm51, %v50
    %s53 = scalar_lea.vmem %s0, 29
    %v54 = vld [vmem:[%s53] sm:$0x1]
    %s55 = scalar_lea.vmem %s0, 60
    %v56 = vld [vmem:[%s55] sm:$0x2]
    %vm57 = vcmask 1041409
    %v58 = vsel %vm57, %v56, %v54
    %s59 = scalar_lea.vmem %s0, 91
    %v60 = vld [vmem:[%s59] sm:$0x4]
    %vm61 = vcmask 1042434
    %v62 = vsel %vm61, %v60, %v58
    %s63 = scalar_lea.vmem %s0, 122
    %v64 = vld [vmem:[%s63] sm:$0x8]
    %vm65 = vcmask 1043459
    %v66 = vsel %vm65, %v64, %v62
    %67 = vrot.lane.b32.xlu0 %v66, 116
    %v68 = vpop.permute.xlu0 %67
    %vm69 = vcmask 982944
    %70 = vst.msk [vmem:[#allocation0] sm:$0xf] %vm69, %v68
    %s71 = scalar_lea.vmem %s0, 28
    %v72 = vld [vmem:[%s71] sm:$0x1]
    %s73 = scalar_lea.vmem %s0, 59
    %v74 = vld [vmem:[%s73] sm:$0x2]
    %vm75 = vcmask 1041409
    %v76 = vsel %vm75, %v74, %v72
    %s77 = scalar_lea.vmem %s0, 90
    %v78 = vld [vmem:[%s77] sm:$0x4]
    %vm79 = vcmask 1042434
    %v80 = vsel %vm79, %v78, %v76
    %s81 = scalar_lea.vmem %s0, 121
    %v82 = vld [vmem:[%s81] sm:$0x8]
    %vm83 = vcmask 1043459
    %v84 = vsel %vm83, %v82, %v80
    %85 = vrot.lane.b32.xlu0 %v84, 112
    %v86 = vpop.permute.xlu0 %85
    %vm87 = vcmask 950144
    %88 = vst.msk [vmem:[#allocation0] sm:$0xf] %vm87, %v86
    %s89 = scalar_lea.vmem %s0, 27
    %v90 = vld [vmem:[%s89] sm:$0x1]
    %s91 = scalar_lea.vmem %s0, 58
    %v92 = vld [vmem:[%s91] sm:$0x2]
    %vm93 = vcmask 1041409
    %v94 = vsel %vm93, %v92, %v90
    %s95 = scalar_lea.vmem %s0, 89
    %v96 = vld [vmem:[%s95] sm:$0x4]
    %vm97 = vcmask 1042434
    %v98 = vsel %vm97, %v96, %v94
    %s99 = scalar_lea.vmem %s0, 120
    %v100 = vld [vmem:[%s99] sm:$0x8]
    %vm101 = vcmask 1043459
    %v102 = vsel %vm101, %v100, %v98
    %103 = vrot.lane.b32.xlu0 %v102, 108
    %v104 = vpop.permute.xlu0 %103
    %vm105 = vcmask 917344
    %106 = vst.msk [vmem:[#allocation0] sm:$0xf] %vm105, %v104
    %s107 = scalar_lea.vmem %s0, 26
    %v108 = vld [vmem:[%s107] sm:$0x1]
    %s109 = scalar_lea.vmem %s0, 57
    %v110 = vld [vmem:[%s109] sm:$0x2]
    %vm111 = vcmask 1041409
    %v112 = vsel %vm111, %v110, %v108
    %s113 = scalar_lea.vmem %s0, 88
    %v114 = vld [vmem:[%s113] sm:$0x4]
    %vm115 = vcmask 1042434
    %v116 = vsel %vm115, %v114, %v112
    %s117 = scalar_lea.vmem %s0, 119
    %v118 = vld [vmem:[%s117] sm:$0x8]
    %vm119 = vcmask 1043459
    %v120 = vsel %vm119, %v118, %v116
    %121 = vrot.lane.b32.xlu0 %v120, 104
    %v122 = vpop.permute.xlu0 %121
    %vm123 = vcmask 884544
    %124 = vst.msk [vmem:[#allocation0] sm:$0xf] %vm123, %v122
    %s125 = scalar_lea.vmem %s0, 25
    %v126 = vld [vmem:[%s125] sm:$0x1]
    %s127 = scalar_lea.vmem %s0, 56
    %v128 = vld [vmem:[%s127] sm:$0x2]
    %vm129 = vcmask 1041409
    %v130 = vsel %vm129, %v128, %v126
    %s131 = scalar_lea.vmem %s0, 87
    %v132 = vld [vmem:[%s131] sm:$0x4]
    %vm133 = vcmask 1042434
    %v134 = vsel %vm133, %v132, %v130
    %s135 = scalar_lea.vmem %s0, 118
    %v136 = vld [vmem:[%s135] sm:$0x8]
    %vm137 = vcmask 1043459
    %v138 = vsel %vm137, %v136, %v134
    %139 = vrot.lane.b32.xlu0 %v138, 100
    %v140 = vpop.permute.xlu0 %139
    %vm141 = vcmask 851744
    %142 = vst.msk [vmem:[#allocation0] sm:$0xf] %vm141, %v140
    %s143 = scalar_lea.vmem %s0, 24
    %v144 = vld [vmem:[%s143] sm:$0x1]
    %s145 = scalar_lea.vmem %s0, 55
    %v146 = vld [vmem:[%s145] sm:$0x2]
    %vm147 = vcmask 1041409
    %v148 = vsel %vm147, %v146, %v144
    %s149 = scalar_lea.vmem %s0, 86
    %v150 = vld [vmem:[%s149] sm:$0x4]
    %vm151 = vcmask 1042434
    %v152 = vsel %vm151, %v150, %v148
    %s153 = scalar_lea.vmem %s0, 117
    %v154 = vld [vmem:[%s153] sm:$0x8]
    %vm155 = vcmask 1043459
    %v156 = vsel %vm155, %v154, %v152
    %157 = vrot.lane.b32.xlu0 %v156, 96
    %v158 = vpop.permute.xlu0 %157
    %vm159 = vcmask 818944
    %160 = vst.msk [vmem:[#allocation0] sm:$0xf] %vm159, %v158
    %s161 = scalar_lea.vmem %s0, 23
    %v162 = vld [vmem:[%s161] sm:$0x1]
    %s163 = scalar_lea.vmem %s0, 54
    %v164 = vld [vmem:[%s163] sm:$0x2]
    %vm165 = vcmask 1041409
    %v166 = vsel %vm165, %v164, %v162
    %s167 = scalar_lea.vmem %s0, 85
    %v168 = vld [vmem:[%s167] sm:$0x4]
    %vm169 = vcmask 1042434
    %v170 = vsel %vm169, %v168, %v166
    %s171 = scalar_lea.vmem %s0, 116
    %v172 = vld [vmem:[%s171] sm:$0x8]
    %vm173 = vcmask 1043459
    %v174 = vsel %vm173, %v172, %v170
    %175 = vrot.lane.b32.xlu0 %v174, 92
    %v176 = vpop.permute.xlu0 %175
    %vm177 = vcmask 786144
    %178 = vst.msk [vmem:[#allocation0] sm:$0xf] %vm177, %v176
    %s179 = scalar_lea.vmem %s0, 22
    %v180 = vld [vmem:[%s179] sm:$0x1]
    %s181 = scalar_lea.vmem %s0, 53
    %v182 = vld [vmem:[%s181] sm:$0x2]
    %vm183 = vcmask 1041409
    %v184 = vsel %vm183, %v182, %v180
    %s185 = scalar_lea.vmem %s0, 84
    %v186 = vld [vmem:[%s185] sm:$0x4]
    %vm187 = vcmask 1042434
    %v188 = vsel %vm187, %v186, %v184
    %s189 = scalar_lea.vmem %s0, 115
    %v190 = vld [vmem:[%s189] sm:$0x8]
    %vm191 = vcmask 1043459
    %v192 = vsel %vm191, %v190, %v188
    %193 = vrot.lane.b32.xlu0 %v192, 88
    %v194 = vpop.permute.xlu0 %193
    %vm195 = vcmask 753344
    %196 = vst.msk [vmem:[#allocation0] sm:$0xf] %vm195, %v194
    %s197 = scalar_lea.vmem %s0, 21
    %v198 = vld [vmem:[%s197] sm:$0x1]
    %s199 = scalar_lea.vmem %s0, 52
    %v200 = vld [vmem:[%s199] sm:$0x2]
    %vm201 = vcmask 1041409
    %v202 = vsel %vm201, %v200, %v198
    %s203 = scalar_lea.vmem %s0, 83
    %v204 = vld [vmem:[%s203] sm:$0x4]
    %vm205 = vcmask 1042434
    %v206 = vsel %vm205, %v204, %v202
    %s207 = scalar_lea.vmem %s0, 114
    %v208 = vld [vmem:[%s207] sm:$0x8]
    %vm209 = vcmask 1043459
    %v210 = vsel %vm209, %v208, %v206
    %211 = vrot.lane.b32.xlu0 %v210, 84
    %v212 = vpop.permute.xlu0 %211
    %vm213 = vcmask 720544
    %214 = vst.msk [vmem:[#allocation0] sm:$0xf] %vm213, %v212
    %s215 = scalar_lea.vmem %s0, 20
    %v216 = vld [vmem:[%s215] sm:$0x1]
    %s217 = scalar_lea.vmem %s0, 51
    %v218 = vld [vmem:[%s217] sm:$0x2]
    %vm219 = vcmask 1041409
    %v220 = vsel %vm219, %v218, %v216
    %s221 = scalar_lea.vmem %s0, 82
    %v222 = vld [vmem:[%s221] sm:$0x4]
    %vm223 = vcmask 1042434
    %v224 = vsel %vm223, %v222, %v220
    %s225 = scalar_lea.vmem %s0, 113
    %v226 = vld [vmem:[%s225] sm:$0x8]
    %vm227 = vcmask 1043459
    %v228 = vsel %vm227, %v226, %v224
    %229 = vrot.lane.b32.xlu0 %v228, 80
    %v230 = vpop.permute.xlu0 %229
    %vm231 = vcmask 687744
    %232 = vst.msk [vmem:[#allocation0] sm:$0xf] %vm231, %v230
    %s233 = scalar_lea.vmem %s0, 19
    %v234 = vld [vmem:[%s233] sm:$0x1]
    %s235 = scalar_lea.vmem %s0, 50
    %v236 = vld [vmem:[%s235] sm:$0x2]
    %vm237 = vcmask 1041409
    %v238 = vsel %vm237, %v236, %v234
    %s239 = scalar_lea.vmem %s0, 81
    %v240 = vld [vmem:[%s239] sm:$0x4]
    %vm241 = vcmask 1042434
    %v242 = vsel %vm241, %v240, %v238
    %s243 = scalar_lea.vmem %s0, 112
    %v244 = vld [vmem:[%s243] sm:$0x8]
    %vm245 = vcmask 1043459
    %v246 = vsel %vm245, %v244, %v242
    %247 = vrot.lane.b32.xlu0 %v246, 76
    %v248 = vpop.permute.xlu0 %247
    %vm249 = vcmask 654944
    %250 = vst.msk [vmem:[#allocation0] sm:$0xf] %vm249, %v248
    %s251 = scalar_lea.vmem %s0, 18
    %v252 = vld [vmem:[%s251] sm:$0x1]
    %s253 = scalar_lea.vmem %s0, 49
    %v254 = vld [vmem:[%s253] sm:$0x2]
    %vm255 = vcmask 1041409
    %v256 = vsel %vm255, %v254, %v252
    %s257 = scalar_lea.vmem %s0, 80
    %v258 = vld [vmem:[%s257] sm:$0x4]
    %vm259 = vcmask 1042434
    %v260 = vsel %vm259, %v258, %v256
    %s261 = scalar_lea.vmem %s0, 111
    %v262 = vld [vmem:[%s261] sm:$0x8]
    %vm263 = vcmask 1043459
    %v264 = vsel %vm263, %v262, %v260
    %265 = vrot.lane.b32.xlu0 %v264, 72
    %v266 = vpop.permute.xlu0 %265
    %vm267 = vcmask 622144
    %268 = vst.msk [vmem:[#allocation0] sm:$0xf] %vm267, %v266
    %s269 = scalar_lea.vmem %s0, 17
    %v270 = vld [vmem:[%s269] sm:$0x1]
    %s271 = scalar_lea.vmem %s0, 48
    %v272 = vld [vmem:[%s271] sm:$0x2]
    %vm273 = vcmask 1041409
    %v274 = vsel %vm273, %v272, %v270
    %s275 = scalar_lea.vmem %s0, 79
    %v276 = vld [vmem:[%s275] sm:$0x4]
    %vm277 = vcmask 1042434
    %v278 = vsel %vm277, %v276, %v274
    %s279 = scalar_lea.vmem %s0, 110
    %v280 = vld [vmem:[%s279] sm:$0x8]
    %vm281 = vcmask 1043459
    %v282 = vsel %vm281, %v280, %v278
    %283 = vrot.lane.b32.xlu0 %v282, 68
    %v284 = vpop.permute.xlu0 %283
    %vm285 = vcmask 589344
    %286 = vst.msk [vmem:[#allocation0] sm:$0xf] %vm285, %v284
    %s287 = scalar_lea.vmem %s0, 16
    %v288 = vld [vmem:[%s287] sm:$0x1]
    %s289 = scalar_lea.vmem %s0, 47
    %v290 = vld [vmem:[%s289] sm:$0x2]
    %vm291 = vcmask 1041409
    %v292 = vsel %vm291, %v290, %v288
    %s293 = scalar_lea.vmem %s0, 78
    %v294 = vld [vmem:[%s293] sm:$0x4]
    %vm295 = vcmask 1042434
    %v296 = vsel %vm295, %v294, %v292
    %s297 = scalar_lea.vmem %s0, 109
    %v298 = vld [vmem:[%s297] sm:$0x8]
    %vm299 = vcmask 1043459
    %v300 = vsel %vm299, %v298, %v296
    %301 = vrot.lane.b32.xlu0 %v300, 64
    %v302 = vpop.permute.xlu0 %301
    %vm303 = vcmask 556544
    %304 = vst.msk [vmem:[#allocation0] sm:$0xf] %vm303, %v302
    %s305 = scalar_lea.vmem %s0, 15
    %v306 = vld [vmem:[%s305] sm:$0x1]
    %s307 = scalar_lea.vmem %s0, 46
    %v308 = vld [vmem:[%s307] sm:$0x2]
    %vm309 = vcmask 1041409
    %v310 = vsel %vm309, %v308, %v306
    %s311 = scalar_lea.vmem %s0, 77
    %v312 = vld [vmem:[%s311] sm:$0x4]
    %vm313 = vcmask 1042434
    %v314 = vsel %vm313, %v312, %v310
    %s315 = scalar_lea.vmem %s0, 108
    %v316 = vld [vmem:[%s315] sm:$0x8]
    %vm317 = vcmask 1043459
    %v318 = vsel %vm317, %v316, %v314
    %319 = vrot.lane.b32.xlu0 %v318, 60
    %v320 = vpop.permute.xlu0 %319
    %vm321 = vcmask 523744
    %322 = vst.msk [vmem:[#allocation0] sm:$0xf] %vm321, %v320
    %s323 = scalar_lea.vmem %s0, 14
    %v324 = vld [vmem:[%s323] sm:$0x1]
    %s325 = scalar_lea.vmem %s0, 45
    %v326 = vld [vmem:[%s325] sm:$0x2]
    %vm327 = vcmask 1041409
    %v328 = vsel %vm327, %v326, %v324
    %s329 = scalar_lea.vmem %s0, 76
    %v330 = vld [vmem:[%s329] sm:$0x4]
    %vm331 = vcmask 1042434
    %v332 = vsel %vm331, %v330, %v328
    %s333 = scalar_lea.vmem %s0, 107
    %v334 = vld [vmem:[%s333] sm:$0x8]
    %vm335 = vcmask 1043459
    %v336 = vsel %vm335, %v334, %v332
    %337 = vrot.lane.b32.xlu0 %v336, 56
    %v338 = vpop.permute.xlu0 %337
    %vm339 = vcmask 490944
    %340 = vst.msk [vmem:[#allocation0] sm:$0xf] %vm339, %v338
    %s341 = scalar_lea.vmem %s0, 13
    %v342 = vld [vmem:[%s341] sm:$0x1]
    %s343 = scalar_lea.vmem %s0, 44
    %v344 = vld [vmem:[%s343] sm:$0x2]
    %vm345 = vcmask 1041409
    %v346 = vsel %vm345, %v344, %v342
    %s347 = scalar_lea.vmem %s0, 75
    %v348 = vld [vmem:[%s347] sm:$0x4]
    %vm349 = vcmask 1042434
    %v350 = vsel %vm349, %v348, %v346
    %s351 = scalar_lea.vmem %s0, 106
    %v352 = vld [vmem:[%s351] sm:$0x8]
    %vm353 = vcmask 1043459
    %v354 = vsel %vm353, %v352, %v350
    %355 = vrot.lane.b32.xlu0 %v354, 52
    %v356 = vpop.permute.xlu0 %355
    %vm357 = vcmask 458144
    %358 = vst.msk [vmem:[#allocation0] sm:$0xf] %vm357, %v356
    %s359 = scalar_lea.vmem %s0, 12
    %v360 = vld [vmem:[%s359] sm:$0x1]
    %s361 = scalar_lea.vmem %s0, 43
    %v362 = vld [vmem:[%s361] sm:$0x2]
    %vm363 = vcmask 1041409
    %v364 = vsel %vm363, %v362, %v360
    %s365 = scalar_lea.vmem %s0, 74
    %v366 = vld [vmem:[%s365] sm:$0x4]
    %vm367 = vcmask 1042434
    %v368 = vsel %vm367, %v366, %v364
    %s369 = scalar_lea.vmem %s0, 105
    %v370 = vld [vmem:[%s369] sm:$0x8]
    %vm371 = vcmask 1043459
    %v372 = vsel %vm371, %v370, %v368
    %373 = vrot.lane.b32.xlu0 %v372, 48
    %v374 = vpop.permute.xlu0 %373
    %vm375 = vcmask 425344
    %376 = vst.msk [vmem:[#allocation0] sm:$0xf] %vm375, %v374
    %s377 = scalar_lea.vmem %s0, 11
    %v378 = vld [vmem:[%s377] sm:$0x1]
    %s379 = scalar_lea.vmem %s0, 42
    %v380 = vld [vmem:[%s379] sm:$0x2]
    %vm381 = vcmask 1041409
    %v382 = vsel %vm381, %v380, %v378
    %s383 = scalar_lea.vmem %s0, 73
    %v384 = vld [vmem:[%s383] sm:$0x4]
    %vm385 = vcmask 1042434
    %v386 = vsel %vm385, %v384, %v382
    %s387 = scalar_lea.vmem %s0, 104
    %v388 = vld [vmem:[%s387] sm:$0x8]
    %vm389 = vcmask 1043459
    %v390 = vsel %vm389, %v388, %v386
    %391 = vrot.lane.b32.xlu0 %v390, 44
    %v392 = vpop.permute.xlu0 %391
    %vm393 = vcmask 392544
    %394 = vst.msk [vmem:[#allocation0] sm:$0xf] %vm393, %v392
    %s395 = scalar_lea.vmem %s0, 10
    %v396 = vld [vmem:[%s395] sm:$0x1]
    %s397 = scalar_lea.vmem %s0, 41
    %v398 = vld [vmem:[%s397] sm:$0x2]
    %vm399 = vcmask 1041409
    %v400 = vsel %vm399, %v398, %v396
    %s401 = scalar_lea.vmem %s0, 72
    %v402 = vld [vmem:[%s401] sm:$0x4]
    %vm403 = vcmask 1042434
    %v404 = vsel %vm403, %v402, %v400
    %s405 = scalar_lea.vmem %s0, 103
    %v406 = vld [vmem:[%s405] sm:$0x8]
    %vm407 = vcmask 1043459
    %v408 = vsel %vm407, %v406, %v404
    %409 = vrot.lane.b32.xlu0 %v408, 40
    %v410 = vpop.permute.xlu0 %409
    %vm411 = vcmask 359744
    %412 = vst.msk [vmem:[#allocation0] sm:$0xf] %vm411, %v410
    %s413 = scalar_lea.vmem %s0, 9
    %v414 = vld [vmem:[%s413] sm:$0x1]
    %s415 = scalar_lea.vmem %s0, 40
    %v416 = vld [vmem:[%s415] sm:$0x2]
    %vm417 = vcmask 1041409
    %v418 = vsel %vm417, %v416, %v414
    %s419 = scalar_lea.vmem %s0, 71
    %v420 = vld [vmem:[%s419] sm:$0x4]
    %vm421 = vcmask 1042434
    %v422 = vsel %vm421, %v420, %v418
    %s423 = scalar_lea.vmem %s0, 102
    %v424 = vld [vmem:[%s423] sm:$0x8]
    %vm425 = vcmask 1043459
    %v426 = vsel %vm425, %v424, %v422
    %427 = vrot.lane.b32.xlu0 %v426, 36
    %v428 = vpop.permute.xlu0 %427
    %vm429 = vcmask 326944
    %430 = vst.msk [vmem:[#allocation0] sm:$0xf] %vm429, %v428
    %s431 = scalar_lea.vmem %s0, 8
    %v432 = vld [vmem:[%s431] sm:$0x1]
    %s433 = scalar_lea.vmem %s0, 39
    %v434 = vld [vmem:[%s433] sm:$0x2]
    %vm435 = vcmask 1041409
    %v436 = vsel %vm435, %v434, %v432
    %s437 = scalar_lea.vmem %s0, 70
    %v438 = vld [vmem:[%s437] sm:$0x4]
    %vm439 = vcmask 1042434
    %v440 = vsel %vm439, %v438, %v436
    %s441 = scalar_lea.vmem %s0, 101
    %v442 = vld [vmem:[%s441] sm:$0x8]
    %vm443 = vcmask 1043459
    %v444 = vsel %vm443, %v442, %v440
    %445 = vrot.lane.b32.xlu0 %v444, 32
    %v446 = vpop.permute.xlu0 %445
    %vm447 = vcmask 294144
    %448 = vst.msk [vmem:[#allocation0] sm:$0xf] %vm447, %v446
    %s449 = scalar_lea.vmem %s0, 7
    %v450 = vld [vmem:[%s449] sm:$0x1]
    %s451 = scalar_lea.vmem %s0, 38
    %v452 = vld [vmem:[%s451] sm:$0x2]
    %vm453 = vcmask 1041409
    %v454 = vsel %vm453, %v452, %v450
    %s455 = scalar_lea.vmem %s0, 69
    %v456 = vld [vmem:[%s455] sm:$0x4]
    %vm457 = vcmask 1042434
    %v458 = vsel %vm457, %v456, %v454
    %s459 = scalar_lea.vmem %s0, 100
    %v460 = vld [vmem:[%s459] sm:$0x8]
    %vm461 = vcmask 1043459
    %v462 = vsel %vm461, %v460, %v458
    %463 = vrot.lane.b32.xlu0 %v462, 28
    %v464 = vpop.permute.xlu0 %463
    %vm465 = vcmask 261344
    %466 = vst.msk [vmem:[#allocation0] sm:$0xf] %vm465, %v464
    %s467 = scalar_lea.vmem %s0, 6
    %v468 = vld [vmem:[%s467] sm:$0x1]
    %s469 = scalar_lea.vmem %s0, 37
    %v470 = vld [vmem:[%s469] sm:$0x2]
    %vm471 = vcmask 1041409
    %v472 = vsel %vm471, %v470, %v468
    %s473 = scalar_lea.vmem %s0, 68
    %v474 = vld [vmem:[%s473] sm:$0x4]
    %vm475 = vcmask 1042434
    %v476 = vsel %vm475, %v474, %v472
    %s477 = scalar_lea.vmem %s0, 99
    %v478 = vld [vmem:[%s477] sm:$0x8]
    %vm479 = vcmask 1043459
    %v480 = vsel %vm479, %v478, %v476
    %481 = vrot.lane.b32.xlu0 %v480, 24
    %v482 = vpop.permute.xlu0 %481
    %vm483 = vcmask 228544
    %484 = vst.msk [vmem:[#allocation0] sm:$0xf] %vm483, %v482
    %s485 = scalar_lea.vmem %s0, 5
    %v486 = vld [vmem:[%s485] sm:$0x1]
    %s487 = scalar_lea.vmem %s0, 36
    %v488 = vld [vmem:[%s487] sm:$0x2]
    %vm489 = vcmask 1041409
    %v490 = vsel %vm489, %v488, %v486
    %s491 = scalar_lea.vmem %s0, 67
    %v492 = vld [vmem:[%s491] sm:$0x4]
    %vm493 = vcmask 1042434
    %v494 = vsel %vm493, %v492, %v490
    %s495 = scalar_lea.vmem %s0, 98
    %v496 = vld [vmem:[%s495] sm:$0x8]
    %vm497 = vcmask 1043459
    %v498 = vsel %vm497, %v496, %v494
    %499 = vrot.lane.b32.xlu0 %v498, 20
    %v500 = vpop.permute.xlu0 %499
    %vm501 = vcmask 195744
    %502 = vst.msk [vmem:[#allocation0] sm:$0xf] %vm501, %v500
    %s503 = scalar_lea.vmem %s0, 4
    %v504 = vld [vmem:[%s503] sm:$0x1]
    %s505 = scalar_lea.vmem %s0, 35
    %v506 = vld [vmem:[%s505] sm:$0x2]
    %vm507 = vcmask 1041409
    %v508 = vsel %vm507, %v506, %v504
    %s509 = scalar_lea.vmem %s0, 66
    %v510 = vld [vmem:[%s509] sm:$0x4]
    %vm511 = vcmask 1042434
    %v512 = vsel %vm511, %v510, %v508
    %s513 = scalar_lea.vmem %s0, 97
    %v514 = vld [vmem:[%s513] sm:$0x8]
    %vm515 = vcmask 1043459
    %v516 = vsel %vm515, %v514, %v512
    %517 = vrot.lane.b32.xlu0 %v516, 16
    %v518 = vpop.permute.xlu0 %517
    %vm519 = vcmask 162944
    %520 = vst.msk [vmem:[#allocation0] sm:$0xf] %vm519, %v518
    %s521 = scalar_lea.vmem %s0, 3
    %v522 = vld [vmem:[%s521] sm:$0x1]
    %s523 = scalar_lea.vmem %s0, 34
    %v524 = vld [vmem:[%s523] sm:$0x2]
    %vm525 = vcmask 1041409
    %v526 = vsel %vm525, %v524, %v522
    %s527 = scalar_lea.vmem %s0, 65
    %v528 = vld [vmem:[%s527] sm:$0x4]
    %vm529 = vcmask 1042434
    %v530 = vsel %vm529, %v528, %v526
    %s531 = scalar_lea.vmem %s0, 96
    %v532 = vld [vmem:[%s531] sm:$0x8]
    %vm533 = vcmask 1043459
    %v534 = vsel %vm533, %v532, %v530
    %535 = vrot.lane.b32.xlu0 %v534, 12
    %v536 = vpop.permute.xlu0 %535
    %vm537 = vcmask 130144
    %538 = vst.msk [vmem:[#allocation0] sm:$0xf] %vm537, %v536
    %s539 = scalar_lea.vmem %s0, 2
    %v540 = vld [vmem:[%s539] sm:$0x1]
    %s541 = scalar_lea.vmem %s0, 33
    %v542 = vld [vmem:[%s541] sm:$0x2]
    %vm543 = vcmask 1041409
    %v544 = vsel %vm543, %v542, %v540
    %s545 = scalar_lea.vmem %s0, 64
    %v546 = vld [vmem:[%s545] sm:$0x4]
    %vm547 = vcmask 1042434
    %v548 = vsel %vm547, %v546, %v544
    %s549 = scalar_lea.vmem %s0, 95
    %v550 = vld [vmem:[%s549] sm:$0x8]
    %vm551 = vcmask 1043459
    %v552 = vsel %vm551, %v550, %v548
    %553 = vrot.lane.b32.xlu0 %v552, 8
    %v554 = vpop.permute.xlu0 %553
    %vm555 = vcmask 97344
    %556 = vst.msk [vmem:[#allocation0] sm:$0xf] %vm555, %v554
    %s557 = scalar_lea.vmem %s0, 1
    %v558 = vld [vmem:[%s557] sm:$0x1]
    %s559 = scalar_lea.vmem %s0, 32
    %v560 = vld [vmem:[%s559] sm:$0x2]
    %vm561 = vcmask 1041409
    %v562 = vsel %vm561, %v560, %v558
    %s563 = scalar_lea.vmem %s0, 63
    %v564 = vld [vmem:[%s563] sm:$0x4]
    %vm565 = vcmask 1042434
    %v566 = vsel %vm565, %v564, %v562
    %s567 = scalar_lea.vmem %s0, 94
    %v568 = vld [vmem:[%s567] sm:$0x8]
    %vm569 = vcmask 1043459
    %v570 = vsel %vm569, %v568, %v566
    %571 = vrot.lane.b32.xlu0 %v570, 4
    %v572 = vpop.permute.xlu0 %571
    %vm573 = vcmask 64544
    %574 = vst.msk [vmem:[#allocation0] sm:$0xf] %vm573, %v572
    %s576 = sshll.u32 1, 4
    %s577 = ssub.s32 %s576, 1
    %v579 = vld [vmem:[#allocation0] sm:%s577]
    %s580 = sshll.u32 1, 4
    %s581 = ssub.s32 %s580, 1
    %582 = vst [vmem:[%s1] sm:%s581] %v579

// kernel: rb_forward_nchw.1
$region0: #{rb_forward_nchw.1}
  #allocation0 [shape = 'u32[]', space=smem, size = 0x4, offset = 0x4, fixed_abs, tag = 'smem constant byte address 0x4 - core index']
  #allocation1 [shape = 'u32[144,128]{1,0:T(1,128)}', space=vmem, size = 0x12000, scoped, tag = 'internal scratch']
  %s0 = inlined_call_operand.vmem [shape: f32[2,8,128], index: 0, kind: input, shape index: {}, may-alias: {0,11}]
  %s1 = inlined_call_operand.vmem [shape: f32[16,16], index: 1, kind: input, shape index: {}]
  %s2 = inlined_call_operand.vmem [shape: f32[16,16], index: 2, kind: input, shape index: {}]
  %s3 = inlined_call_operand.vmem [shape: f32[3,128,128], index: 3, kind: input, shape index: {}]
  %s4 = inlined_call_operand.vmem [shape: f32[1,128], index: 4, kind: input, shape index: {}]
  %s5 = inlined_call_operand.vmem [shape: f32[3,128,128], index: 5, kind: input, shape index: {}]
  %s6 = inlined_call_operand.vmem [shape: f32[1,128], index: 6, kind: input, shape index: {}]
  %s7 = inlined_call_operand.vmem [shape: f32[128,4], index: 7, kind: input, shape index: {}]
  %s8 = inlined_call_operand.vmem [shape: f32[4,128], index: 8, kind: input, shape index: {}]
  %s9 = inlined_call_operand.vmem [shape: f32[4,4], index: 9, kind: input, shape index: {}]
  %s10 = inlined_call_operand.vmem [shape: f32[4,4], index: 10, kind: input, shape index: {}]
  %s11 = inlined_call_operand.vmem [shape: f32[2,8,128], index: 11, kind: output, shape index: {}, may-alias: {0,11}]
  %s12 = sld [smem:[#allocation0]]
  $region54: #{rb_forward_nchw.1} parent=0
    _
  %s14 = ssub.s32 1, %s12
  %s15 = scalar_select 0, %s14, %s12
  // Predicated region
  $region2: #{rb_forward_nchw.1} parent=0 // pred_check
    _
  $region3: #{rb_forward_nchw.1} parent=0 // pred_check_branch
    %17 = sbr.rel (0) target = $region5
  $region4: #{rb_forward_nchw.1} parent=0 // pred_region
    _
  $region5: #{rb_forward_nchw.1} parent=0 // pred_fallthru
    _
  // Predicated region
  $region6: #{rb_forward_nchw.1} parent=0 // pred_check
    _
  $region7: #{rb_forward_nchw.1} parent=0 // pred_check_branch
    %19 = sbr.rel (0) target = $region9
  $region8: #{rb_forward_nchw.1} parent=0 // pred_region
    _
  $region9: #{rb_forward_nchw.1} parent=0 // pred_fallthru
    _
  // Predicated region
  $region10: #{rb_forward_nchw.1} parent=0 // pred_check
    _
  $region11: #{rb_forward_nchw.1} parent=0 // pred_check_branch
    %21 = sbr.rel (0) target = $region13
  $region12: #{rb_forward_nchw.1} parent=0 // pred_region
    _
  $region13: #{rb_forward_nchw.1} parent=0 // pred_fallthru
    _
  // Predicated region
  $region14: #{rb_forward_nchw.1} parent=0 // pred_check
    _
  $region15: #{rb_forward_nchw.1} parent=0 // pred_check_branch
    %23 = sbr.rel (0) target = $region17
  $region16: #{rb_forward_nchw.1} parent=0 // pred_region
    _
  $region17: #{rb_forward_nchw.1} parent=0 // pred_fallthru
    _
  // Predicated region
  $region18: #{rb_forward_nchw.1} parent=0 // pred_check
    _
  $region19: #{rb_forward_nchw.1} parent=0 // pred_check_branch
    %25 = sbr.rel (0) target = $region21
  $region20: #{rb_forward_nchw.1} parent=0 // pred_region
    _
  $region21: #{rb_forward_nchw.1} parent=0 // pred_fallthru
    _
  // Predicated region
  $region22: #{rb_forward_nchw.1} parent=0 // pred_check
    _
  $region23: #{rb_forward_nchw.1} parent=0 // pred_check_branch
    %27 = sbr.rel (0) target = $region25
  $region24: #{rb_forward_nchw.1} parent=0 // pred_region
    _
  $region25: #{rb_forward_nchw.1} parent=0 // pred_fallthru
    _
  // Predicated region
  $region26: #{rb_forward_nchw.1} parent=0 // pred_check
    _
  $region27: #{rb_forward_nchw.1} parent=0 // pred_check_branch
    %29 = sbr.rel (0) target = $region29
  $region28: #{rb_forward_nchw.1} parent=0 // pred_region
    _
  $region29: #{rb_forward_nchw.1} parent=0 // pred_fallthru
    _
  // Predicated region
  $region30: #{rb_forward_nchw.1} parent=0 // pred_check
    _
  $region31: #{rb_forward_nchw.1} parent=0 // pred_check_branch
    %31 = sbr.rel (0) target = $region33
  $region32: #{rb_forward_nchw.1} parent=0 // pred_region
    _
  $region33: #{rb_forward_nchw.1} parent=0 // pred_fallthru
    _
  // Predicated region
  $region34: #{rb_forward_nchw.1} parent=0 // pred_check
    _
  $region35: #{rb_forward_nchw.1} parent=0 // pred_check_branch
    %33 = sbr.rel (0) target = $region37
  $region36: #{rb_forward_nchw.1} parent=0 // pred_region
    _
  $region37: #{rb_forward_nchw.1} parent=0 // pred_fallthru
    _
  // Predicated region
  $region38: #{rb_forward_nchw.1} parent=0 // pred_check
    _
  $region39: #{rb_forward_nchw.1} parent=0 // pred_check_branch
    %35 = sbr.rel (0) target = $region41
  $region40: #{rb_forward_nchw.1} parent=0 // pred_region
    _
  $region41: #{rb_forward_nchw.1} parent=0 // pred_fallthru
    _
  // Predicated region
  $region42: #{rb_forward_nchw.1} parent=0 // pred_check
    _
  $region43: #{rb_forward_nchw.1} parent=0 // pred_check_branch
    %37 = sbr.rel (0) target = $region45
  $region44: #{rb_forward_nchw.1} parent=0 // pred_region
    _
  $region45: #{rb_forward_nchw.1} parent=0 // pred_fallthru
    _
  %v38 = vld [vmem:[%s0] sm:$0xff]
  %v39 = vld [vmem:[%s0 + $0x8] sm:$0xff]
  %v40 = vld [vmem:[%s1] sm:$0xff]
  %v41 = vld [vmem:[%s1 + $0x8] sm:$0xff]
  %v42 = vld [vmem:[%s2] sm:$0xff]
  %v43 = vld [vmem:[%s2 + $0x8] sm:$0xff]
  %vm44 = vcmask 130048
  %v46 = vsel %vm44, %v40, 0
  %v49 = vsel %vm44, %v41, 0
  %51 = vmatprep.subr.mxu0 0.0
  %52 = vmatpush1.msra.mxu0 0.0
  %53 = vmatprep.subr.mxu0 0.0
  %54 = vmatpush1.msra.mxu0 0.0
  %55 = vmatprep.subr.mxu0 0.0
  %56 = vmatpush1.msra.mxu0 0.0
  %57 = vmatprep.subr.mxu0 0.0
  %58 = vmatpush1.msra.mxu0 0.0
  %59 = vmatprep.subr.mxu0 0.0
  %60 = vmatpush1.msra.mxu0 0.0
  %61 = vmatprep.subr.mxu0 0.0
  %62 = vmatpush1.msra.mxu0 0.0
  %63 = vmatprep.subr.mxu0 0.0
  %64 = vmatpush1.msra.mxu0 0.0
  %65 = vmatprep.subr.mxu0 0.0
  %66 = vmatpush1.msra.mxu0 0.0
  %67 = vmatprep.subr.mxu0 0.0
  %68 = vmatpush1.msra.mxu0 0.0
  %69 = vmatprep.subr.mxu0 0.0
  %70 = vmatpush1.msra.mxu0 0.0
  %71 = vmatprep.subr.mxu0 0.0
  %72 = vmatpush1.msra.mxu0 0.0
  %73 = vmatprep.subr.mxu0 0.0
  %74 = vmatpush1.msra.mxu0 0.0
  %75 = vmatprep.subr.mxu0 0.0
  %76 = vmatpush1.msra.mxu0 0.0
  %77 = vmatprep.subr.mxu0 0.0
  %78 = vmatpush1.msra.mxu0 0.0
  %79 = vmatprep.subr.mxu0 0.0
  %80 = vmatpush1.msra.mxu0 %v39
  %81 = vmatprep.subr.mxu0 0.0
  %82 = vmatpush1.msra.mxu0 %v38
  %83 = vmatprep.subr.mxu0 0.0
  %84 = vmatpush2.msra.mxu0 0.0
  %85 = vmatprep.subr.mxu0 0.0
  %86 = vmatpush2.msra.mxu0 0.0
  %87 = vmatprep.subr.mxu0 0.0
  %88 = vmatpush2.msra.mxu0 0.0
  %89 = vmatprep.subr.mxu0 0.0
  %90 = vmatpush2.msra.mxu0 0.0
  %91 = vmatprep.subr.mxu0 0.0
  %92 = vmatpush2.msra.mxu0 0.0
  %93 = vmatprep.subr.mxu0 0.0
  %94 = vmatpush2.msra.mxu0 0.0
  %95 = vmatprep.subr.mxu0 0.0
  %96 = vmatpush2.msra.mxu0 0.0
  %97 = vmatprep.subr.mxu0 0.0
  %98 = vmatpush2.msra.mxu0 0.0
  %99 = vmatprep.subr.mxu0 0.0
  %100 = vmatpush2.msra.mxu0 0.0
  %101 = vmatprep.subr.mxu0 0.0
  %102 = vmatpush2.msra.mxu0 0.0
  %103 = vmatprep.subr.mxu0 0.0
  %104 = vmatpush2.msra.mxu0 0.0
  %105 = vmatprep.subr.mxu0 0.0
  %106 = vmatpush2.msra.mxu0 0.0
  %107 = vmatprep.subr.mxu0 0.0
  %108 = vmatpush2.msra.mxu0 0.0
  %109 = vmatprep.subr.mxu0 0.0
  %110 = vmatpush2.msra.mxu0 0.0
  %111 = vmatprep.subr.mxu0 0.0
  %112 = vmatpush2.msra.mxu0 0.0
  %113 = vmatprep.subr.mxu0 0.0
  %114 = vmatpush2.msra.mxu0 0.0
  %115 = vmatprep.mubr.f32.mxu0 0.0
  %116 = vmatmul.mubr.f32.gmra.mxu0 %v46
  %v117 = vpop.f32.mrf.mxu0
  %v118 = vadd.f32 0.0, %v117
  %v119 = vpop.f32.mrf.mxu0
  %120 = vmatprep.mubr.f32.mxu0 0.0
  %121 = vmatmul.mubr.f32.gmra.mxu0 %v49
  %v122 = vpop.f32.mrf.mxu0
  %v123 = vadd.f32 0.0, %v122
  %v124 = vpop.f32.mrf.mxu0
  %125 = vdwg.mxu0
  %v127 = vsel %vm44, %v42, 0
  %v130 = vsel %vm44, %v43, 0
  %132 = vmatprep.subr.mxu0 0.0
  %133 = vmatpush1.msra.mxu0 0.0
  %134 = vmatprep.subr.mxu0 0.0
  %135 = vmatpush1.msra.mxu0 0.0
  %136 = vmatprep.subr.mxu0 0.0
  %137 = vmatpush1.msra.mxu0 0.0
  %138 = vmatprep.subr.mxu0 0.0
  %139 = vmatpush1.msra.mxu0 0.0
  %140 = vmatprep.subr.mxu0 0.0
  %141 = vmatpush1.msra.mxu0 0.0
  %142 = vmatprep.subr.mxu0 0.0
  %143 = vmatpush1.msra.mxu0 0.0
  %144 = vmatprep.subr.mxu0 0.0
  %145 = vmatpush1.msra.mxu0 0.0
  %146 = vmatprep.subr.mxu0 0.0
  %147 = vmatpush1.msra.mxu0 0.0
  %148 = vmatprep.subr.mxu0 0.0
  %149 = vmatpush1.msra.mxu0 0.0
  %150 = vmatprep.subr.mxu0 0.0
  %151 = vmatpush1.msra.mxu0 0.0
  %152 = vmatprep.subr.mxu0 0.0
  %153 = vmatpush1.msra.mxu0 0.0
  %154 = vmatprep.subr.mxu0 0.0
  %155 = vmatpush1.msra.mxu0 0.0
  %156 = vmatprep.subr.mxu0 0.0
  %157 = vmatpush1.msra.mxu0 0.0
  %158 = vmatprep.subr.mxu0 0.0
  %159 = vmatpush1.msra.mxu0 0.0
  %160 = vmatprep.subr.mxu0 0.0
  %161 = vmatpush1.msra.mxu0 %v39
  %162 = vmatprep.subr.mxu0 0.0
  %163 = vmatpush1.msra.mxu0 %v38
  %164 = vmatprep.subr.mxu0 0.0
  %165 = vmatpush2.msra.mxu0 0.0
  %166 = vmatprep.subr.mxu0 0.0
  %167 = vmatpush2.msra.mxu0 0.0
  %168 = vmatprep.subr.mxu0 0.0
  %169 = vmatpush2.msra.mxu0 0.0
  %170 = vmatprep.subr.mxu0 0.0
  %171 = vmatpush2.msra.mxu0 0.0
  %172 = vmatprep.subr.mxu0 0.0
  %173 = vmatpush2.msra.mxu0 0.0
  %174 = vmatprep.subr.mxu0 0.0
  %175 = vmatpush2.msra.mxu0 0.0
  %176 = vmatprep.subr.mxu0 0.0
  %177 = vmatpush2.msra.mxu0 0.0
  %178 = vmatprep.subr.mxu0 0.0
  %179 = vmatpush2.msra.mxu0 0.0
  %180 = vmatprep.subr.mxu0 0.0
  %181 = vmatpush2.msra.mxu0 0.0
  %182 = vmatprep.subr.mxu0 0.0
  %183 = vmatpush2.msra.mxu0 0.0
  %184 = vmatprep.subr.mxu0 0.0
  %185 = vmatpush2.msra.mxu0 0.0
  %186 = vmatprep.subr.mxu0 0.0
  %187 = vmatpush2.msra.mxu0 0.0
  %188 = vmatprep.subr.mxu0 0.0
  %189 = vmatpush2.msra.mxu0 0.0
  %190 = vmatprep.subr.mxu0 0.0
  %191 = vmatpush2.msra.mxu0 0.0
  %192 = vmatprep.subr.mxu0 0.0
  %193 = vmatpush2.msra.mxu0 0.0
  %194 = vmatprep.subr.mxu0 0.0
  %195 = vmatpush2.msra.mxu0 0.0
  %196 = vmatprep.mubr.f32.mxu0 0.0
  %197 = vmatmul.mubr.f32.gmra.mxu0 %v127
  %v198 = vpop.f32.mrf.mxu0
  %v199 = vadd.f32 0.0, %v198
  %v200 = vpop.f32.mrf.mxu0
  %201 = vmatprep.mubr.f32.mxu0 0.0
  %202 = vmatmul.mubr.f32.gmra.mxu0 %v130
  %v203 = vpop.f32.mrf.mxu0
  %v204 = vadd.f32 0.0, %v203
  %v205 = vpop.f32.mrf.mxu0
  %206 = vdwg.mxu0
  %v207 = vld [vmem:[%s4] sm:$0x1]
  %v209 = vlaneseq
  %v210 = vshrl.u32 %v209, 7
  %v211 = vsub.s32 0, %v210
  %v212 = vrot.slane %v207, %v211
  %v214 = vld [vmem:[%s3] sm:$0xff]
  %v215 = vld [vmem:[%s3 + $0x8] sm:$0xff]
  %v216 = vld [vmem:[%s3 + $0x10] sm:$0xff]
  %v217 = vld [vmem:[%s3 + $0x18] sm:$0xff]
  %v218 = vld [vmem:[%s3 + $0x20] sm:$0xff]
  %v219 = vld [vmem:[%s3 + $0x28] sm:$0xff]
  %v220 = vld [vmem:[%s3 + $0x30] sm:$0xff]
  %v221 = vld [vmem:[%s3 + $0x38] sm:$0xff]
  %v222 = vld [vmem:[%s3 + $0x40] sm:$0xff]
  %v223 = vld [vmem:[%s3 + $0x48] sm:$0xff]
  %v224 = vld [vmem:[%s3 + $0x50] sm:$0xff]
  %v225 = vld [vmem:[%s3 + $0x58] sm:$0xff]
  %v226 = vld [vmem:[%s3 + $0x60] sm:$0xff]
  %v227 = vld [vmem:[%s3 + $0x68] sm:$0xff]
  %v228 = vld [vmem:[%s3 + $0x70] sm:$0xff]
  %v229 = vld [vmem:[%s3 + $0x78] sm:$0xff]
  %230 = vmatprep.subr.mxu0 0.0
  %231 = vmatpush1.msra.mxu0 %v229
  %232 = vmatprep.subr.mxu0 0.0
  %233 = vmatpush1.msra.mxu0 %v228
  %234 = vmatprep.subr.mxu0 0.0
  %235 = vmatpush1.msra.mxu0 %v227
  %236 = vmatprep.subr.mxu0 0.0
  %237 = vmatpush1.msra.mxu0 %v226
  %238 = vmatprep.subr.mxu0 0.0
  %239 = vmatpush1.msra.mxu0 %v225
  %240 = vmatprep.subr.mxu0 0.0
  %241 = vmatpush1.msra.mxu0 %v224
  %242 = vmatprep.subr.mxu0 0.0
  %243 = vmatpush1.msra.mxu0 %v223
  %244 = vmatprep.subr.mxu0 0.0
  %245 = vmatpush1.msra.mxu0 %v222
  %246 = vmatprep.subr.mxu0 0.0
  %247 = vmatpush1.msra.mxu0 %v221
  %248 = vmatprep.subr.mxu0 0.0
  %249 = vmatpush1.msra.mxu0 %v220
  %250 = vmatprep.subr.mxu0 0.0
  %251 = vmatpush1.msra.mxu0 %v219
  %252 = vmatprep.subr.mxu0 0.0
  %253 = vmatpush1.msra.mxu0 %v218
  %254 = vmatprep.subr.mxu0 0.0
  %255 = vmatpush1.msra.mxu0 %v217
  %256 = vmatprep.subr.mxu0 0.0
  %257 = vmatpush1.msra.mxu0 %v216
  %258 = vmatprep.subr.mxu0 0.0
  %259 = vmatpush1.msra.mxu0 %v215
  %260 = vmatprep.subr.mxu0 0.0
  %261 = vmatpush1.msra.mxu0 %v214
  %262 = vmatprep.subr.mxu0 0.0
  %263 = vmatpush2.msra.mxu0 0.0
  %264 = vmatprep.subr.mxu0 0.0
  %265 = vmatpush2.msra.mxu0 0.0
  %266 = vmatprep.subr.mxu0 0.0
  %267 = vmatpush2.msra.mxu0 0.0
  %268 = vmatprep.subr.mxu0 0.0
  %269 = vmatpush2.msra.mxu0 0.0
  %270 = vmatprep.subr.mxu0 0.0
  %271 = vmatpush2.msra.mxu0 0.0
  %272 = vmatprep.subr.mxu0 0.0
  %273 = vmatpush2.msra.mxu0 0.0
  %274 = vmatprep.subr.mxu0 0.0
  %275 = vmatpush2.msra.mxu0 0.0
  %276 = vmatprep.subr.mxu0 0.0
  %277 = vmatpush2.msra.mxu0 0.0
  %278 = vmatprep.subr.mxu0 0.0
  %279 = vmatpush2.msra.mxu0 0.0
  %280 = vmatprep.subr.mxu0 0.0
  %281 = vmatpush2.msra.mxu0 0.0
  %282 = vmatprep.subr.mxu0 0.0
  %283 = vmatpush2.msra.mxu0 0.0
  %284 = vmatprep.subr.mxu0 0.0
  %285 = vmatpush2.msra.mxu0 0.0
  %286 = vmatprep.subr.mxu0 0.0
  %287 = vmatpush2.msra.mxu0 0.0
  %288 = vmatprep.subr.mxu0 0.0
  %289 = vmatpush2.msra.mxu0 0.0
  %290 = vmatprep.subr.mxu0 0.0
  %291 = vmatpush2.msra.mxu0 0.0
  %292 = vmatprep.subr.mxu0 0.0
  %293 = vmatpush2.msra.mxu0 0.0
  %294 = vmatprep.mubr.f32.mxu0 0.0
  %295 = vmatmul.mubr.f32.gmra.mxu0 %v118
  %v296 = vpop.f32.mrf.mxu0
  %v297 = vadd.f32 0.0, %v296
  %v298 = vpop.f32.mrf.mxu0
  %299 = vmatprep.mubr.f32.mxu0 0.0
  %300 = vmatmul.mubr.f32.gmra.mxu0 %v123
  %v301 = vpop.f32.mrf.mxu0
  %v302 = vadd.f32 0.0, %v301
  %v303 = vpop.f32.mrf.mxu0
  %304 = vdwg.mxu0
  %v305 = vadd.f32 %v212, %v297
  %v306 = vadd.f32 %v212, %v302
  %s307 = scalar_lea.vmem %s3, 128
  %v308 = vld [vmem:[%s307] sm:$0xff]
  %v309 = vld [vmem:[%s307 + $0x8] sm:$0xff]
  %v310 = vld [vmem:[%s307 + $0x10] sm:$0xff]
  %v311 = vld [vmem:[%s307 + $0x18] sm:$0xff]
  %v312 = vld [vmem:[%s307 + $0x20] sm:$0xff]
  %v313 = vld [vmem:[%s307 + $0x28] sm:$0xff]
  %v314 = vld [vmem:[%s307 + $0x30] sm:$0xff]
  %v315 = vld [vmem:[%s307 + $0x38] sm:$0xff]
  %v316 = vld [vmem:[%s307 + $0x40] sm:$0xff]
  %v317 = vld [vmem:[%s307 + $0x48] sm:$0xff]
  %v318 = vld [vmem:[%s307 + $0x50] sm:$0xff]
  %v319 = vld [vmem:[%s307 + $0x58] sm:$0xff]
  %v320 = vld [vmem:[%s307 + $0x60] sm:$0xff]
  %v321 = vld [vmem:[%s307 + $0x68] sm:$0xff]
  %v322 = vld [vmem:[%s307 + $0x70] sm:$0xff]
  %v323 = vld [vmem:[%s307 + $0x78] sm:$0xff]
  %324 = vmatprep.subr.mxu0 0.0
  %325 = vmatpush1.msra.mxu0 %v323
  %326 = vmatprep.subr.mxu0 0.0
  %327 = vmatpush1.msra.mxu0 %v322
  %328 = vmatprep.subr.mxu0 0.0
  %329 = vmatpush1.msra.mxu0 %v321
  %330 = vmatprep.subr.mxu0 0.0
  %331 = vmatpush1.msra.mxu0 %v320
  %332 = vmatprep.subr.mxu0 0.0
  %333 = vmatpush1.msra.mxu0 %v319
  %334 = vmatprep.subr.mxu0 0.0
  %335 = vmatpush1.msra.mxu0 %v318
  %336 = vmatprep.subr.mxu0 0.0
  %337 = vmatpush1.msra.mxu0 %v317
  %338 = vmatprep.subr.mxu0 0.0
  %339 = vmatpush1.msra.mxu0 %v316
  %340 = vmatprep.subr.mxu0 0.0
  %341 = vmatpush1.msra.mxu0 %v315
  %342 = vmatprep.subr.mxu0 0.0
  %343 = vmatpush1.msra.mxu0 %v314
  %344 = vmatprep.subr.mxu0 0.0
  %345 = vmatpush1.msra.mxu0 %v313
  %346 = vmatprep.subr.mxu0 0.0
  %347 = vmatpush1.msra.mxu0 %v312
  %348 = vmatprep.subr.mxu0 0.0
  %349 = vmatpush1.msra.mxu0 %v311
  %350 = vmatprep.subr.mxu0 0.0
  %351 = vmatpush1.msra.mxu0 %v310
  %352 = vmatprep.subr.mxu0 0.0
  %353 = vmatpush1.msra.mxu0 %v309
  %354 = vmatprep.subr.mxu0 0.0
  %355 = vmatpush1.msra.mxu0 %v308
  %356 = vmatprep.subr.mxu0 0.0
  %357 = vmatpush2.msra.mxu0 0.0
  %358 = vmatprep.subr.mxu0 0.0
  %359 = vmatpush2.msra.mxu0 0.0
  %360 = vmatprep.subr.mxu0 0.0
  %361 = vmatpush2.msra.mxu0 0.0
  %362 = vmatprep.subr.mxu0 0.0
  %363 = vmatpush2.msra.mxu0 0.0
  %364 = vmatprep.subr.mxu0 0.0
  %365 = vmatpush2.msra.mxu0 0.0
  %366 = vmatprep.subr.mxu0 0.0
  %367 = vmatpush2.msra.mxu0 0.0
  %368 = vmatprep.subr.mxu0 0.0
  %369 = vmatpush2.msra.mxu0 0.0
  %370 = vmatprep.subr.mxu0 0.0
  %371 = vmatpush2.msra.mxu0 0.0
  %372 = vmatprep.subr.mxu0 0.0
  %373 = vmatpush2.msra.mxu0 0.0
  %374 = vmatprep.subr.mxu0 0.0
  %375 = vmatpush2.msra.mxu0 0.0
  %376 = vmatprep.subr.mxu0 0.0
  %377 = vmatpush2.msra.mxu0 0.0
  %378 = vmatprep.subr.mxu0 0.0
  %379 = vmatpush2.msra.mxu0 0.0
  %380 = vmatprep.subr.mxu0 0.0
  %381 = vmatpush2.msra.mxu0 0.0
  %382 = vmatprep.subr.mxu0 0.0
  %383 = vmatpush2.msra.mxu0 0.0
  %384 = vmatprep.subr.mxu0 0.0
  %385 = vmatpush2.msra.mxu0 0.0
  %386 = vmatprep.subr.mxu0 0.0
  %387 = vmatpush2.msra.mxu0 0.0
  %388 = vmatprep.mubr.f32.mxu0 0.0
  %389 = vmatmul.mubr.f32.gmra.mxu0 %v38
  %v390 = vpop.f32.mrf.mxu0
  %v391 = vadd.f32 0.0, %v390
  %v392 = vpop.f32.mrf.mxu0
  %393 = vmatprep.mubr.f32.mxu0 0.0
  %394 = vmatmul.mubr.f32.gmra.mxu0 %v39
  %v395 = vpop.f32.mrf.mxu0
  %v396 = vadd.f32 0.0, %v395
  %v397 = vpop.f32.mrf.mxu0
  %398 = vdwg.mxu0
  %v399 = vadd.f32 %v305, %v391
  %v400 = vadd.f32 %v306, %v396
  %s401 = scalar_lea.vmem %s3, 256
  %v402 = vld [vmem:[%s401] sm:$0xff]
  %v403 = vld [vmem:[%s401 + $0x8] sm:$0xff]
  %v404 = vld [vmem:[%s401 + $0x10] sm:$0xff]
  %v405 = vld [vmem:[%s401 + $0x18] sm:$0xff]
  %v406 = vld [vmem:[%s401 + $0x20] sm:$0xff]
  %v407 = vld [vmem:[%s401 + $0x28] sm:$0xff]
  %v408 = vld [vmem:[%s401 + $0x30] sm:$0xff]
  %v409 = vld [vmem:[%s401 + $0x38] sm:$0xff]
  %v410 = vld [vmem:[%s401 + $0x40] sm:$0xff]
  %v411 = vld [vmem:[%s401 + $0x48] sm:$0xff]
  %v412 = vld [vmem:[%s401 + $0x50] sm:$0xff]
  %v413 = vld [vmem:[%s401 + $0x58] sm:$0xff]
  %v414 = vld [vmem:[%s401 + $0x60] sm:$0xff]
  %v415 = vld [vmem:[%s401 + $0x68] sm:$0xff]
  %v416 = vld [vmem:[%s401 + $0x70] sm:$0xff]
  %v417 = vld [vmem:[%s401 + $0x78] sm:$0xff]
  %418 = vmatprep.subr.mxu0 0.0
  %419 = vmatpush1.msra.mxu0 %v417
  %420 = vmatprep.subr.mxu0 0.0
  %421 = vmatpush1.msra.mxu0 %v416
  %422 = vmatprep.subr.mxu0 0.0
  %423 = vmatpush1.msra.mxu0 %v415
  %424 = vmatprep.subr.mxu0 0.0
  %425 = vmatpush1.msra.mxu0 %v414
  %426 = vmatprep.subr.mxu0 0.0
  %427 = vmatpush1.msra.mxu0 %v413
  %428 = vmatprep.subr.mxu0 0.0
  %429 = vmatpush1.msra.mxu0 %v412
  %430 = vmatprep.subr.mxu0 0.0
  %431 = vmatpush1.msra.mxu0 %v411
  %432 = vmatprep.subr.mxu0 0.0
  %433 = vmatpush1.msra.mxu0 %v410
  %434 = vmatprep.subr.mxu0 0.0
  %435 = vmatpush1.msra.mxu0 %v409
  %436 = vmatprep.subr.mxu0 0.0
  %437 = vmatpush1.msra.mxu0 %v408
  %438 = vmatprep.subr.mxu0 0.0
  %439 = vmatpush1.msra.mxu0 %v407
  %440 = vmatprep.subr.mxu0 0.0
  %441 = vmatpush1.msra.mxu0 %v406
  %442 = vmatprep.subr.mxu0 0.0
  %443 = vmatpush1.msra.mxu0 %v405
  %444 = vmatprep.subr.mxu0 0.0
  %445 = vmatpush1.msra.mxu0 %v404
  %446 = vmatprep.subr.mxu0 0.0
  %447 = vmatpush1.msra.mxu0 %v403
  %448 = vmatprep.subr.mxu0 0.0
  %449 = vmatpush1.msra.mxu0 %v402
  %450 = vmatprep.subr.mxu0 0.0
  %451 = vmatpush2.msra.mxu0 0.0
  %452 = vmatprep.subr.mxu0 0.0
  %453 = vmatpush2.msra.mxu0 0.0
  %454 = vmatprep.subr.mxu0 0.0
  %455 = vmatpush2.msra.mxu0 0.0
  %456 = vmatprep.subr.mxu0 0.0
  %457 = vmatpush2.msra.mxu0 0.0
  %458 = vmatprep.subr.mxu0 0.0
  %459 = vmatpush2.msra.mxu0 0.0
  %460 = vmatprep.subr.mxu0 0.0
  %461 = vmatpush2.msra.mxu0 0.0
  %462 = vmatprep.subr.mxu0 0.0
  %463 = vmatpush2.msra.mxu0 0.0
  %464 = vmatprep.subr.mxu0 0.0
  %465 = vmatpush2.msra.mxu0 0.0
  %466 = vmatprep.subr.mxu0 0.0
  %467 = vmatpush2.msra.mxu0 0.0
  %468 = vmatprep.subr.mxu0 0.0
  %469 = vmatpush2.msra.mxu0 0.0
  %470 = vmatprep.subr.mxu0 0.0
  %471 = vmatpush2.msra.mxu0 0.0
  %472 = vmatprep.subr.mxu0 0.0
  %473 = vmatpush2.msra.mxu0 0.0
  %474 = vmatprep.subr.mxu0 0.0
  %475 = vmatpush2.msra.mxu0 0.0
  %476 = vmatprep.subr.mxu0 0.0
  %477 = vmatpush2.msra.mxu0 0.0
  %478 = vmatprep.subr.mxu0 0.0
  %479 = vmatpush2.msra.mxu0 0.0
  %480 = vmatprep.subr.mxu0 0.0
  %481 = vmatpush2.msra.mxu0 0.0
  %482 = vmatprep.mubr.f32.mxu0 0.0
  %483 = vmatmul.mubr.f32.gmra.mxu0 %v199
  %v484 = vpop.f32.mrf.mxu0
  %v485 = vadd.f32 0.0, %v484
  %v486 = vpop.f32.mrf.mxu0
  %487 = vmatprep.mubr.f32.mxu0 0.0
  %488 = vmatmul.mubr.f32.gmra.mxu0 %v204
  %v489 = vpop.f32.mrf.mxu0
  %v490 = vadd.f32 0.0, %v489
  %v491 = vpop.f32.mrf.mxu0
  %492 = vdwg.mxu0
  %v493 = vadd.f32 %v399, %v485
  %v494 = vadd.f32 %v400, %v490
  %vm495 = vcmp.gt.f32.partialorder %v493, 0.0
  %vm496 = vcmp.gt.f32.partialorder %v494, 0.0
  %v497 = vmul.f32 %v493, 0.01
  %v498 = vmul.f32 %v494, 0.01
  %v499 = vsel %vm495, %v493, %v497
  %v500 = vsel %vm496, %v494, %v498
  %501 = vmatprep.subr.mxu0 0.0
  %502 = vmatpush1.msra.mxu0 0.0
  %503 = vmatprep.subr.mxu0 0.0
  %504 = vmatpush1.msra.mxu0 0.0
  %505 = vmatprep.subr.mxu0 0.0
  %506 = vmatpush1.msra.mxu0 0.0
  %507 = vmatprep.subr.mxu0 0.0
  %508 = vmatpush1.msra.mxu0 0.0
  %509 = vmatprep.subr.mxu0 0.0
  %510 = vmatpush1.msra.mxu0 0.0
  %511 = vmatprep.subr.mxu0 0.0
  %512 = vmatpush1.msra.mxu0 0.0
  %513 = vmatprep.subr.mxu0 0.0
  %514 = vmatpush1.msra.mxu0 0.0
  %515 = vmatprep.subr.mxu0 0.0
  %516 = vmatpush1.msra.mxu0 0.0
  %517 = vmatprep.subr.mxu0 0.0
  %518 = vmatpush1.msra.mxu0 0.0
  %519 = vmatprep.subr.mxu0 0.0
  %520 = vmatpush1.msra.mxu0 0.0
  %521 = vmatprep.subr.mxu0 0.0
  %522 = vmatpush1.msra.mxu0 0.0
  %523 = vmatprep.subr.mxu0 0.0
  %524 = vmatpush1.msra.mxu0 0.0
  %525 = vmatprep.subr.mxu0 0.0
  %526 = vmatpush1.msra.mxu0 0.0
  %527 = vmatprep.subr.mxu0 0.0
  %528 = vmatpush1.msra.mxu0 0.0
  %529 = vmatprep.subr.mxu0 0.0
  %530 = vmatpush1.msra.mxu0 %v500
  %531 = vmatprep.subr.mxu0 0.0
  %532 = vmatpush1.msra.mxu0 %v499
  %533 = vmatprep.subr.mxu0 0.0
  %534 = vmatpush2.msra.mxu0 0.0
  %535 = vmatprep.subr.mxu0 0.0
  %536 = vmatpush2.msra.mxu0 0.0
  %537 = vmatprep.subr.mxu0 0.0
  %538 = vmatpush2.msra.mxu0 0.0
  %539 = vmatprep.subr.mxu0 0.0
  %540 = vmatpush2.msra.mxu0 0.0
  %541 = vmatprep.subr.mxu0 0.0
  %542 = vmatpush2.msra.mxu0 0.0
  %543 = vmatprep.subr.mxu0 0.0
  %544 = vmatpush2.msra.mxu0 0.0
  %545 = vmatprep.subr.mxu0 0.0
  %546 = vmatpush2.msra.mxu0 0.0
  %547 = vmatprep.subr.mxu0 0.0
  %548 = vmatpush2.msra.mxu0 0.0
  %549 = vmatprep.subr.mxu0 0.0
  %550 = vmatpush2.msra.mxu0 0.0
  %551 = vmatprep.subr.mxu0 0.0
  %552 = vmatpush2.msra.mxu0 0.0
  %553 = vmatprep.subr.mxu0 0.0
  %554 = vmatpush2.msra.mxu0 0.0
  %555 = vmatprep.subr.mxu0 0.0
  %556 = vmatpush2.msra.mxu0 0.0
  %557 = vmatprep.subr.mxu0 0.0
  %558 = vmatpush2.msra.mxu0 0.0
  %559 = vmatprep.subr.mxu0 0.0
  %560 = vmatpush2.msra.mxu0 0.0
  %561 = vmatprep.subr.mxu0 0.0
  %562 = vmatpush2.msra.mxu0 0.0
  %563 = vmatprep.subr.mxu0 0.0
  %564 = vmatpush2.msra.mxu0 0.0
  %565 = vmatprep.mubr.f32.mxu0 0.0
  %566 = vmatmul.mubr.f32.gmra.mxu0 %v46
  %v567 = vpop.f32.mrf.mxu0
  %v568 = vadd.f32 0.0, %v567
  %v569 = vpop.f32.mrf.mxu0
  %570 = vmatprep.mubr.f32.mxu0 0.0
  %571 = vmatmul.mubr.f32.gmra.mxu0 %v49
  %v572 = vpop.f32.mrf.mxu0
  %v573 = vadd.f32 0.0, %v572
  %v574 = vpop.f32.mrf.mxu0
  %575 = vdwg.mxu0
  %576 = vmatprep.subr.mxu0 0.0
  %577 = vmatpush1.msra.mxu0 0.0
  %578 = vmatprep.subr.mxu0 0.0
  %579 = vmatpush1.msra.mxu0 0.0
  %580 = vmatprep.subr.mxu0 0.0
  %581 = vmatpush1.msra.mxu0 0.0
  %582 = vmatprep.subr.mxu0 0.0
  %583 = vmatpush1.msra.mxu0 0.0
  %584 = vmatprep.subr.mxu0 0.0
  %585 = vmatpush1.msra.mxu0 0.0
  %586 = vmatprep.subr.mxu0 0.0
  %587 = vmatpush1.msra.mxu0 0.0
  %588 = vmatprep.subr.mxu0 0.0
  %589 = vmatpush1.msra.mxu0 0.0
  %590 = vmatprep.subr.mxu0 0.0
  %591 = vmatpush1.msra.mxu0 0.0
  %592 = vmatprep.subr.mxu0 0.0
  %593 = vmatpush1.msra.mxu0 0.0
  %594 = vmatprep.subr.mxu0 0.0
  %595 = vmatpush1.msra.mxu0 0.0
  %596 = vmatprep.subr.mxu0 0.0
  %597 = vmatpush1.msra.mxu0 0.0
  %598 = vmatprep.subr.mxu0 0.0
  %599 = vmatpush1.msra.mxu0 0.0
  %600 = vmatprep.subr.mxu0 0.0
  %601 = vmatpush1.msra.mxu0 0.0
  %602 = vmatprep.subr.mxu0 0.0
  %603 = vmatpush1.msra.mxu0 0.0
  %604 = vmatprep.subr.mxu0 0.0
  %605 = vmatpush1.msra.mxu0 %v500
  %606 = vmatprep.subr.mxu0 0.0
  %607 = vmatpush1.msra.mxu0 %v499
  %608 = vmatprep.subr.mxu0 0.0
  %609 = vmatpush2.msra.mxu0 0.0
  %610 = vmatprep.subr.mxu0 0.0
  %611 = vmatpush2.msra.mxu0 0.0
  %612 = vmatprep.subr.mxu0 0.0
  %613 = vmatpush2.msra.mxu0 0.0
  %614 = vmatprep.subr.mxu0 0.0
  %615 = vmatpush2.msra.mxu0 0.0
  %616 = vmatprep.subr.mxu0 0.0
  %617 = vmatpush2.msra.mxu0 0.0
  %618 = vmatprep.subr.mxu0 0.0
  %619 = vmatpush2.msra.mxu0 0.0
  %620 = vmatprep.subr.mxu0 0.0
  %621 = vmatpush2.msra.mxu0 0.0
  %622 = vmatprep.subr.mxu0 0.0
  %623 = vmatpush2.msra.mxu0 0.0
  %624 = vmatprep.subr.mxu0 0.0
  %625 = vmatpush2.msra.mxu0 0.0
  %626 = vmatprep.subr.mxu0 0.0
  %627 = vmatpush2.msra.mxu0 0.0
  %628 = vmatprep.subr.mxu0 0.0
  %629 = vmatpush2.msra.mxu0 0.0
  %630 = vmatprep.subr.mxu0 0.0
  %631 = vmatpush2.msra.mxu0 0.0
  %632 = vmatprep.subr.mxu0 0.0
  %633 = vmatpush2.msra.mxu0 0.0
  %634 = vmatprep.subr.mxu0 0.0
  %635 = vmatpush2.msra.mxu0 0.0
  %636 = vmatprep.subr.mxu0 0.0
  %637 = vmatpush2.msra.mxu0 0.0
  %638 = vmatprep.subr.mxu0 0.0
  %639 = vmatpush2.msra.mxu0 0.0
  %640 = vmatprep.mubr.f32.mxu0 0.0
  %641 = vmatmul.mubr.f32.gmra.mxu0 %v127
  %v642 = vpop.f32.mrf.mxu0
  %v643 = vadd.f32 0.0, %v642
  %v644 = vpop.f32.mrf.mxu0
  %645 = vmatprep.mubr.f32.mxu0 0.0
  %646 = vmatmul.mubr.f32.gmra.mxu0 %v130
  %v647 = vpop.f32.mrf.mxu0
  %v648 = vadd.f32 0.0, %v647
  %v649 = vpop.f32.mrf.mxu0
  %650 = vdwg.mxu0
  %v651 = vld [vmem:[%s6] sm:$0x1]
  %v653 = vlaneseq
  %v654 = vshrl.u32 %v653, 7
  %v655 = vsub.s32 0, %v654
  %v656 = vrot.slane %v651, %v655
  %v658 = vld [vmem:[%s5] sm:$0xff]
  %v659 = vld [vmem:[%s5 + $0x8] sm:$0xff]
  %v660 = vld [vmem:[%s5 + $0x10] sm:$0xff]
  %v661 = vld [vmem:[%s5 + $0x18] sm:$0xff]
  %v662 = vld [vmem:[%s5 + $0x20] sm:$0xff]
  %v663 = vld [vmem:[%s5 + $0x28] sm:$0xff]
  %v664 = vld [vmem:[%s5 + $0x30] sm:$0xff]
  %v665 = vld [vmem:[%s5 + $0x38] sm:$0xff]
  %v666 = vld [vmem:[%s5 + $0x40] sm:$0xff]
  %v667 = vld [vmem:[%s5 + $0x48] sm:$0xff]
  %v668 = vld [vmem:[%s5 + $0x50] sm:$0xff]
  %v669 = vld [vmem:[%s5 + $0x58] sm:$0xff]
  %v670 = vld [vmem:[%s5 + $0x60] sm:$0xff]
  %v671 = vld [vmem:[%s5 + $0x68] sm:$0xff]
  %v672 = vld [vmem:[%s5 + $0x70] sm:$0xff]
  %v673 = vld [vmem:[%s5 + $0x78] sm:$0xff]
  %674 = vmatprep.subr.mxu0 0.0
  %675 = vmatpush1.msra.mxu0 %v673
  %676 = vmatprep.subr.mxu0 0.0
  %677 = vmatpush1.msra.mxu0 %v672
  %678 = vmatprep.subr.mxu0 0.0
  %679 = vmatpush1.msra.mxu0 %v671
  %680 = vmatprep.subr.mxu0 0.0
  %681 = vmatpush1.msra.mxu0 %v670
  %682 = vmatprep.subr.mxu0 0.0
  %683 = vmatpush1.msra.mxu0 %v669
  %684 = vmatprep.subr.mxu0 0.0
  %685 = vmatpush1.msra.mxu0 %v668
  %686 = vmatprep.subr.mxu0 0.0
  %687 = vmatpush1.msra.mxu0 %v667
  %688 = vmatprep.subr.mxu0 0.0
  %689 = vmatpush1.msra.mxu0 %v666
  %690 = vmatprep.subr.mxu0 0.0
  %691 = vmatpush1.msra.mxu0 %v665
  %692 = vmatprep.subr.mxu0 0.0
  %693 = vmatpush1.msra.mxu0 %v664
  %694 = vmatprep.subr.mxu0 0.0
  %695 = vmatpush1.msra.mxu0 %v663
  %696 = vmatprep.subr.mxu0 0.0
  %697 = vmatpush1.msra.mxu0 %v662
  %698 = vmatprep.subr.mxu0 0.0
  %699 = vmatpush1.msra.mxu0 %v661
  %700 = vmatprep.subr.mxu0 0.0
  %701 = vmatpush1.msra.mxu0 %v660
  %702 = vmatprep.subr.mxu0 0.0
  %703 = vmatpush1.msra.mxu0 %v659
  %704 = vmatprep.subr.mxu0 0.0
  %705 = vmatpush1.msra.mxu0 %v658
  %706 = vmatprep.subr.mxu0 0.0
  %707 = vmatpush2.msra.mxu0 0.0
  %708 = vmatprep.subr.mxu0 0.0
  %709 = vmatpush2.msra.mxu0 0.0
  %710 = vmatprep.subr.mxu0 0.0
  %711 = vmatpush2.msra.mxu0 0.0
  %712 = vmatprep.subr.mxu0 0.0
  %713 = vmatpush2.msra.mxu0 0.0
  %714 = vmatprep.subr.mxu0 0.0
  %715 = vmatpush2.msra.mxu0 0.0
  %716 = vmatprep.subr.mxu0 0.0
  %717 = vmatpush2.msra.mxu0 0.0
  %718 = vmatprep.subr.mxu0 0.0
  %719 = vmatpush2.msra.mxu0 0.0
  %720 = vmatprep.subr.mxu0 0.0
  %721 = vmatpush2.msra.mxu0 0.0
  %722 = vmatprep.subr.mxu0 0.0
  %723 = vmatpush2.msra.mxu0 0.0
  %724 = vmatprep.subr.mxu0 0.0
  %725 = vmatpush2.msra.mxu0 0.0
  %726 = vmatprep.subr.mxu0 0.0
  %727 = vmatpush2.msra.mxu0 0.0
  %728 = vmatprep.subr.mxu0 0.0
  %729 = vmatpush2.msra.mxu0 0.0
  %730 = vmatprep.subr.mxu0 0.0
  %731 = vmatpush2.msra.mxu0 0.0
  %732 = vmatprep.subr.mxu0 0.0
  %733 = vmatpush2.msra.mxu0 0.0
  %734 = vmatprep.subr.mxu0 0.0
  %735 = vmatpush2.msra.mxu0 0.0
  %736 = vmatprep.subr.mxu0 0.0
  %737 = vmatpush2.msra.mxu0 0.0
  %738 = vmatprep.mubr.f32.mxu0 0.0
  %739 = vmatmul.mubr.f32.gmra.mxu0 %v568
  %v740 = vpop.f32.mrf.mxu0
  %v741 = vadd.f32 0.0, %v740
  %v742 = vpop.f32.mrf.mxu0
  %743 = vmatprep.mubr.f32.mxu0 0.0
  %744 = vmatmul.mubr.f32.gmra.mxu0 %v573
  %v745 = vpop.f32.mrf.mxu0
  %v746 = vadd.f32 0.0, %v745
  %v747 = vpop.f32.mrf.mxu0
  %748 = vdwg.mxu0
  %v749 = vadd.f32 %v656, %v741
  %v750 = vadd.f32 %v656, %v746
  %s751 = scalar_lea.vmem %s5, 128
  %v752 = vld [vmem:[%s751] sm:$0xff]
  %v753 = vld [vmem:[%s751 + $0x8] sm:$0xff]
  %v754 = vld [vmem:[%s751 + $0x10] sm:$0xff]
  %v755 = vld [vmem:[%s751 + $0x18] sm:$0xff]
  %v756 = vld [vmem:[%s751 + $0x20] sm:$0xff]
  %v757 = vld [vmem:[%s751 + $0x28] sm:$0xff]
  %v758 = vld [vmem:[%s751 + $0x30] sm:$0xff]
  %v759 = vld [vmem:[%s751 + $0x38] sm:$0xff]
  %v760 = vld [vmem:[%s751 + $0x40] sm:$0xff]
  %v761 = vld [vmem:[%s751 + $0x48] sm:$0xff]
  %v762 = vld [vmem:[%s751 + $0x50] sm:$0xff]
  %v763 = vld [vmem:[%s751 + $0x58] sm:$0xff]
  %v764 = vld [vmem:[%s751 + $0x60] sm:$0xff]
  %v765 = vld [vmem:[%s751 + $0x68] sm:$0xff]
  %v766 = vld [vmem:[%s751 + $0x70] sm:$0xff]
  %v767 = vld [vmem:[%s751 + $0x78] sm:$0xff]
  %768 = vmatprep.subr.mxu0 0.0
  %769 = vmatpush1.msra.mxu0 %v767
  %770 = vmatprep.subr.mxu0 0.0
  %771 = vmatpush1.msra.mxu0 %v766
  %772 = vmatprep.subr.mxu0 0.0
  %773 = vmatpush1.msra.mxu0 %v765
  %774 = vmatprep.subr.mxu0 0.0
  %775 = vmatpush1.msra.mxu0 %v764
  %776 = vmatprep.subr.mxu0 0.0
  %777 = vmatpush1.msra.mxu0 %v763
  %778 = vmatprep.subr.mxu0 0.0
  %779 = vmatpush1.msra.mxu0 %v762
  %780 = vmatprep.subr.mxu0 0.0
  %781 = vmatpush1.msra.mxu0 %v761
  %782 = vmatprep.subr.mxu0 0.0
  %783 = vmatpush1.msra.mxu0 %v760
  %784 = vmatprep.subr.mxu0 0.0
  %785 = vmatpush1.msra.mxu0 %v759
  %786 = vmatprep.subr.mxu0 0.0
  %787 = vmatpush1.msra.mxu0 %v758
  %788 = vmatprep.subr.mxu0 0.0
  %789 = vmatpush1.msra.mxu0 %v757
  %790 = vmatprep.subr.mxu0 0.0
  %791 = vmatpush1.msra.mxu0 %v756
  %792 = vmatprep.subr.mxu0 0.0
  %793 = vmatpush1.msra.mxu0 %v755
  %794 = vmatprep.subr.mxu0 0.0
  %795 = vmatpush1.msra.mxu0 %v754
  %796 = vmatprep.subr.mxu0 0.0
  %797 = vmatpush1.msra.mxu0 %v753
  %798 = vmatprep.subr.mxu0 0.0
  %799 = vmatpush1.msra.mxu0 %v752
  %800 = vmatprep.subr.mxu0 0.0
  %801 = vmatpush2.msra.mxu0 0.0
  %802 = vmatprep.subr.mxu0 0.0
  %803 = vmatpush2.msra.mxu0 0.0
  %804 = vmatprep.subr.mxu0 0.0
  %805 = vmatpush2.msra.mxu0 0.0
  %806 = vmatprep.subr.mxu0 0.0
  %807 = vmatpush2.msra.mxu0 0.0
  %808 = vmatprep.subr.mxu0 0.0
  %809 = vmatpush2.msra.mxu0 0.0
  %810 = vmatprep.subr.mxu0 0.0
  %811 = vmatpush2.msra.mxu0 0.0
  %812 = vmatprep.subr.mxu0 0.0
  %813 = vmatpush2.msra.mxu0 0.0
  %814 = vmatprep.subr.mxu0 0.0
  %815 = vmatpush2.msra.mxu0 0.0
  %816 = vmatprep.subr.mxu0 0.0
  %817 = vmatpush2.msra.mxu0 0.0
  %818 = vmatprep.subr.mxu0 0.0
  %819 = vmatpush2.msra.mxu0 0.0
  %820 = vmatprep.subr.mxu0 0.0
  %821 = vmatpush2.msra.mxu0 0.0
  %822 = vmatprep.subr.mxu0 0.0
  %823 = vmatpush2.msra.mxu0 0.0
  %824 = vmatprep.subr.mxu0 0.0
  %825 = vmatpush2.msra.mxu0 0.0
  %826 = vmatprep.subr.mxu0 0.0
  %827 = vmatpush2.msra.mxu0 0.0
  %828 = vmatprep.subr.mxu0 0.0
  %829 = vmatpush2.msra.mxu0 0.0
  %830 = vmatprep.subr.mxu0 0.0
  %831 = vmatpush2.msra.mxu0 0.0
  %832 = vmatprep.mubr.f32.mxu0 0.0
  %833 = vmatmul.mubr.f32.gmra.mxu0 %v499
  %v834 = vpop.f32.mrf.mxu0
  %v835 = vadd.f32 0.0, %v834
  %v836 = vpop.f32.mrf.mxu0
  %837 = vmatprep.mubr.f32.mxu0 0.0
  %838 = vmatmul.mubr.f32.gmra.mxu0 %v500
  %v839 = vpop.f32.mrf.mxu0
  %v840 = vadd.f32 0.0, %v839
  %v841 = vpop.f32.mrf.mxu0
  %842 = vdwg.mxu0
  %v843 = vadd.f32 %v749, %v835
  %v844 = vadd.f32 %v750, %v840
  %s845 = scalar_lea.vmem %s5, 256
  %v846 = vld [vmem:[%s845] sm:$0xff]
  %v847 = vld [vmem:[%s845 + $0x8] sm:$0xff]
  %v848 = vld [vmem:[%s845 + $0x10] sm:$0xff]
  %v849 = vld [vmem:[%s845 + $0x18] sm:$0xff]
  %v850 = vld [vmem:[%s845 + $0x20] sm:$0xff]
  %v851 = vld [vmem:[%s845 + $0x28] sm:$0xff]
  %v852 = vld [vmem:[%s845 + $0x30] sm:$0xff]
  %v853 = vld [vmem:[%s845 + $0x38] sm:$0xff]
  %v854 = vld [vmem:[%s845 + $0x40] sm:$0xff]
  %v855 = vld [vmem:[%s845 + $0x48] sm:$0xff]
  %v856 = vld [vmem:[%s845 + $0x50] sm:$0xff]
  %v857 = vld [vmem:[%s845 + $0x58] sm:$0xff]
  %v858 = vld [vmem:[%s845 + $0x60] sm:$0xff]
  %v859 = vld [vmem:[%s845 + $0x68] sm:$0xff]
  %v860 = vld [vmem:[%s845 + $0x70] sm:$0xff]
  %v861 = vld [vmem:[%s845 + $0x78] sm:$0xff]
  %862 = vmatprep.subr.mxu0 0.0
  %863 = vmatpush1.msra.mxu0 %v861
  %864 = vmatprep.subr.mxu0 0.0
  %865 = vmatpush1.msra.mxu0 %v860
  %866 = vmatprep.subr.mxu0 0.0
  %867 = vmatpush1.msra.mxu0 %v859
  %868 = vmatprep.subr.mxu0 0.0
  %869 = vmatpush1.msra.mxu0 %v858
  %870 = vmatprep.subr.mxu0 0.0
  %871 = vmatpush1.msra.mxu0 %v857
  %872 = vmatprep.subr.mxu0 0.0
  %873 = vmatpush1.msra.mxu0 %v856
  %874 = vmatprep.subr.mxu0 0.0
  %875 = vmatpush1.msra.mxu0 %v855
  %876 = vmatprep.subr.mxu0 0.0
  %877 = vmatpush1.msra.mxu0 %v854
  %878 = vmatprep.subr.mxu0 0.0
  %879 = vmatpush1.msra.mxu0 %v853
  %880 = vmatprep.subr.mxu0 0.0
  %881 = vmatpush1.msra.mxu0 %v852
  %882 = vmatprep.subr.mxu0 0.0
  %883 = vmatpush1.msra.mxu0 %v851
  %884 = vmatprep.subr.mxu0 0.0
  %885 = vmatpush1.msra.mxu0 %v850
  %886 = vmatprep.subr.mxu0 0.0
  %887 = vmatpush1.msra.mxu0 %v849
  %888 = vmatprep.subr.mxu0 0.0
  %889 = vmatpush1.msra.mxu0 %v848
  %890 = vmatprep.subr.mxu0 0.0
  %891 = vmatpush1.msra.mxu0 %v847
  %892 = vmatprep.subr.mxu0 0.0
  %893 = vmatpush1.msra.mxu0 %v846
  %894 = vmatprep.subr.mxu0 0.0
  %895 = vmatpush2.msra.mxu0 0.0
  %896 = vmatprep.subr.mxu0 0.0
  %897 = vmatpush2.msra.mxu0 0.0
  %898 = vmatprep.subr.mxu0 0.0
  %899 = vmatpush2.msra.mxu0 0.0
  %900 = vmatprep.subr.mxu0 0.0
  %901 = vmatpush2.msra.mxu0 0.0
  %902 = vmatprep.subr.mxu0 0.0
  %903 = vmatpush2.msra.mxu0 0.0
  %904 = vmatprep.subr.mxu0 0.0
  %905 = vmatpush2.msra.mxu0 0.0
  %906 = vmatprep.subr.mxu0 0.0
  %907 = vmatpush2.msra.mxu0 0.0
  %908 = vmatprep.subr.mxu0 0.0
  %909 = vmatpush2.msra.mxu0 0.0
  %910 = vmatprep.subr.mxu0 0.0
  %911 = vmatpush2.msra.mxu0 0.0
  %912 = vmatprep.subr.mxu0 0.0
  %913 = vmatpush2.msra.mxu0 0.0
  %914 = vmatprep.subr.mxu0 0.0
  %915 = vmatpush2.msra.mxu0 0.0
  %916 = vmatprep.subr.mxu0 0.0
  %917 = vmatpush2.msra.mxu0 0.0
  %918 = vmatprep.subr.mxu0 0.0
  %919 = vmatpush2.msra.mxu0 0.0
  %920 = vmatprep.subr.mxu0 0.0
  %921 = vmatpush2.msra.mxu0 0.0
  %922 = vmatprep.subr.mxu0 0.0
  %923 = vmatpush2.msra.mxu0 0.0
  %924 = vmatprep.subr.mxu0 0.0
  %925 = vmatpush2.msra.mxu0 0.0
  %926 = vmatprep.mubr.f32.mxu0 0.0
  %927 = vmatmul.mubr.f32.gmra.mxu0 %v643
  %v928 = vpop.f32.mrf.mxu0
  %v929 = vadd.f32 0.0, %v928
  %v930 = vpop.f32.mrf.mxu0
  %931 = vmatprep.mubr.f32.mxu0 0.0
  %932 = vmatmul.mubr.f32.gmra.mxu0 %v648
  %v933 = vpop.f32.mrf.mxu0
  %v934 = vadd.f32 0.0, %v933
  %v935 = vpop.f32.mrf.mxu0
  %936 = vdwg.mxu0
  %v937 = vadd.f32 %v843, %v929
  %v938 = vadd.f32 %v844, %v934
  %vm939 = vcmp.gt.f32.partialorder %v937, 0.0
  %vm940 = vcmp.gt.f32.partialorder %v938, 0.0
  %v941 = vmul.f32 %v937, 0.01
  %v942 = vmul.f32 %v938, 0.01
  %v943 = vsel %vm939, %v937, %v941
  %v944 = vsel %vm940, %v938, %v942
  %v945 = vrot.slane %v943, 4
  %v946 = vadd.f32 %v943, %v945
  %v947 = vrot.slane %v946, 2
  %v948 = vadd.f32 %v946, %v947
  %v949 = vrot.slane %v948, 1
  %v950 = vadd.f32 %v948, %v949
  %v951 = vrot.slane %v944, 4
  %v952 = vadd.f32 %v944, %v951
  %v953 = vrot.slane %v952, 2
  %v954 = vadd.f32 %v952, %v953
  %v955 = vrot.slane %v954, 1
  %v956 = vadd.f32 %v954, %v955
  %v957 = vld [vmem:[%s7] sm:$0xff]
  %v958 = vld [vmem:[%s7 + $0x8] sm:$0xff]
  %v959 = vld [vmem:[%s7 + $0x10] sm:$0xff]
  %v960 = vld [vmem:[%s7 + $0x18] sm:$0xff]
  %v961 = vld [vmem:[%s7 + $0x20] sm:$0xff]
  %v962 = vld [vmem:[%s7 + $0x28] sm:$0xff]
  %v963 = vld [vmem:[%s7 + $0x30] sm:$0xff]
  %v964 = vld [vmem:[%s7 + $0x38] sm:$0xff]
  %v965 = vld [vmem:[%s7 + $0x40] sm:$0xff]
  %v966 = vld [vmem:[%s7 + $0x48] sm:$0xff]
  %v967 = vld [vmem:[%s7 + $0x50] sm:$0xff]
  %v968 = vld [vmem:[%s7 + $0x58] sm:$0xff]
  %v969 = vld [vmem:[%s7 + $0x60] sm:$0xff]
  %v970 = vld [vmem:[%s7 + $0x68] sm:$0xff]
  %v971 = vld [vmem:[%s7 + $0x70] sm:$0xff]
  %v972 = vld [vmem:[%s7 + $0x78] sm:$0xff]
  %vm975 = vcmask 1041409
  %v976 = vsel %vm975, %v956, %v950
  %978 = vmatprep.subr.mxu0 0.0
  %979 = vmatpush1.msra.mxu0 %v972
  %980 = vmatprep.subr.mxu0 0.0
  %981 = vmatpush1.msra.mxu0 %v971
  %982 = vmatprep.subr.mxu0 0.0
  %983 = vmatpush1.msra.mxu0 %v970
  %984 = vmatprep.subr.mxu0 0.0
  %985 = vmatpush1.msra.mxu0 %v969
  %986 = vmatprep.subr.mxu0 0.0
  %987 = vmatpush1.msra.mxu0 %v968
  %988 = vmatprep.subr.mxu0 0.0
  %989 = vmatpush1.msra.mxu0 %v967
  %990 = vmatprep.subr.mxu0 0.0
  %991 = vmatpush1.msra.mxu0 %v966
  %992 = vmatprep.subr.mxu0 0.0
  %993 = vmatpush1.msra.mxu0 %v965
  %994 = vmatprep.subr.mxu0 0.0
  %995 = vmatpush1.msra.mxu0 %v964
  %996 = vmatprep.subr.mxu0 0.0
  %997 = vmatpush1.msra.mxu0 %v963
  %998 = vmatprep.subr.mxu0 0.0
  %999 = vmatpush1.msra.mxu0 %v962
  %1000 = vmatprep.subr.mxu0 0.0
  %1001 = vmatpush1.msra.mxu0 %v961
  %1002 = vmatprep.subr.mxu0 0.0
  %1003 = vmatpush1.msra.mxu0 %v960
  %1004 = vmatprep.subr.mxu0 0.0
  %1005 = vmatpush1.msra.mxu0 %v959
  %1006 = vmatprep.subr.mxu0 0.0
  %1007 = vmatpush1.msra.mxu0 %v958
  %1008 = vmatprep.subr.mxu0 0.0
  %1009 = vmatpush1.msra.mxu0 %v957
  %1010 = vmatprep.subr.mxu0 0.0
  %1011 = vmatpush2.msra.mxu0 0.0
  %1012 = vmatprep.subr.mxu0 0.0
  %1013 = vmatpush2.msra.mxu0 0.0
  %1014 = vmatprep.subr.mxu0 0.0
  %1015 = vmatpush2.msra.mxu0 0.0
  %1016 = vmatprep.subr.mxu0 0.0
  %1017 = vmatpush2.msra.mxu0 0.0
  %1018 = vmatprep.subr.mxu0 0.0
  %1019 = vmatpush2.msra.mxu0 0.0
  %1020 = vmatprep.subr.mxu0 0.0
  %1021 = vmatpush2.msra.mxu0 0.0
  %1022 = vmatprep.subr.mxu0 0.0
  %1023 = vmatpush2.msra.mxu0 0.0
  %1024 = vmatprep.subr.mxu0 0.0
  %1025 = vmatpush2.msra.mxu0 0.0
  %1026 = vmatprep.subr.mxu0 0.0
  %1027 = vmatpush2.msra.mxu0 0.0
  %1028 = vmatprep.subr.mxu0 0.0
  %1029 = vmatpush2.msra.mxu0 0.0
  %1030 = vmatprep.subr.mxu0 0.0
  %1031 = vmatpush2.msra.mxu0 0.0
  %1032 = vmatprep.subr.mxu0 0.0
  %1033 = vmatpush2.msra.mxu0 0.0
  %1034 = vmatprep.subr.mxu0 0.0
  %1035 = vmatpush2.msra.mxu0 0.0
  %1036 = vmatprep.subr.mxu0 0.0
  %1037 = vmatpush2.msra.mxu0 0.0
  %1038 = vmatprep.subr.mxu0 0.0
  %1039 = vmatpush2.msra.mxu0 0.0
  %1040 = vmatprep.subr.mxu0 0.0
  %1041 = vmatpush2.msra.mxu0 0.0
  %1042 = vmatprep.mubr.f32.mxu0 0.0
  %1043 = vmatmul.mubr.f32.gmra.mxu0 %v976
  %v1044 = vpop.f32.mrf.mxu0
  %v1045 = vadd.f32 0.0, %v1044
  %v1046 = vpop.f32.mrf.mxu0
  %1047 = vdwg.mxu0
  %v1048 = vmul.f32 %v1045, 0.00390625
  %v1049 = vld [vmem:[%s9] sm:$0xf]
  %vm1050 = vcmask 31744
  %v1052 = vsel %vm1050, %v1048, 0
  %vm1054 = vcmask 1043456
  %v1056 = vsel %vm1054, %v1049, 0
  %1058 = vmatprep.subr.mxu0 0.0
  %1059 = vmatpush1.msra.mxu0 0.0
  %1060 = vmatprep.subr.mxu0 0.0
  %1061 = vmatpush1.msra.mxu0 0.0
  %1062 = vmatprep.subr.mxu0 0.0
  %1063 = vmatpush1.msra.mxu0 0.0
  %1064 = vmatprep.subr.mxu0 0.0
  %1065 = vmatpush1.msra.mxu0 0.0
  %1066 = vmatprep.subr.mxu0 0.0
  %1067 = vmatpush1.msra.mxu0 0.0
  %1068 = vmatprep.subr.mxu0 0.0
  %1069 = vmatpush1.msra.mxu0 0.0
  %1070 = vmatprep.subr.mxu0 0.0
  %1071 = vmatpush1.msra.mxu0 0.0
  %1072 = vmatprep.subr.mxu0 0.0
  %1073 = vmatpush1.msra.mxu0 0.0
  %1074 = vmatprep.subr.mxu0 0.0
  %1075 = vmatpush1.msra.mxu0 0.0
  %1076 = vmatprep.subr.mxu0 0.0
  %1077 = vmatpush1.msra.mxu0 0.0
  %1078 = vmatprep.subr.mxu0 0.0
  %1079 = vmatpush1.msra.mxu0 0.0
  %1080 = vmatprep.subr.mxu0 0.0
  %1081 = vmatpush1.msra.mxu0 0.0
  %1082 = vmatprep.subr.mxu0 0.0
  %1083 = vmatpush1.msra.mxu0 0.0
  %1084 = vmatprep.subr.mxu0 0.0
  %1085 = vmatpush1.msra.mxu0 0.0
  %1086 = vmatprep.subr.mxu0 0.0
  %1087 = vmatpush1.msra.mxu0 0.0
  %1088 = vmatprep.subr.mxu0 0.0
  %1089 = vmatpush1.msra.mxu0 %v1056
  %1090 = vmatprep.subr.mxu0 0.0
  %1091 = vmatpush2.msra.mxu0 0.0
  %1092 = vmatprep.subr.mxu0 0.0
  %1093 = vmatpush2.msra.mxu0 0.0
  %1094 = vmatprep.subr.mxu0 0.0
  %1095 = vmatpush2.msra.mxu0 0.0
  %1096 = vmatprep.subr.mxu0 0.0
  %1097 = vmatpush2.msra.mxu0 0.0
  %1098 = vmatprep.subr.mxu0 0.0
  %1099 = vmatpush2.msra.mxu0 0.0
  %1100 = vmatprep.subr.mxu0 0.0
  %1101 = vmatpush2.msra.mxu0 0.0
  %1102 = vmatprep.subr.mxu0 0.0
  %1103 = vmatpush2.msra.mxu0 0.0
  %1104 = vmatprep.subr.mxu0 0.0
  %1105 = vmatpush2.msra.mxu0 0.0
  %1106 = vmatprep.subr.mxu0 0.0
  %1107 = vmatpush2.msra.mxu0 0.0
  %1108 = vmatprep.subr.mxu0 0.0
  %1109 = vmatpush2.msra.mxu0 0.0
  %1110 = vmatprep.subr.mxu0 0.0
  %1111 = vmatpush2.msra.mxu0 0.0
  %1112 = vmatprep.subr.mxu0 0.0
  %1113 = vmatpush2.msra.mxu0 0.0
  %1114 = vmatprep.subr.mxu0 0.0
  %1115 = vmatpush2.msra.mxu0 0.0
  %1116 = vmatprep.subr.mxu0 0.0
  %1117 = vmatpush2.msra.mxu0 0.0
  %1118 = vmatprep.subr.mxu0 0.0
  %1119 = vmatpush2.msra.mxu0 0.0
  %1120 = vmatprep.subr.mxu0 0.0
  %1121 = vmatpush2.msra.mxu0 0.0
  %1122 = vmatprep.mubr.f32.mxu0 0.0
  %1123 = vmatmul.mubr.f32.gmra.mxu0 %v1052
  %v1124 = vpop.f32.mrf.mxu0
  %v1125 = vadd.f32 0.0, %v1124
  %v1126 = vpop.f32.mrf.mxu0
  %1127 = vdwg.mxu0
  %vm1128 = vcmp.gt.f32.partialorder %v1125, 0.0
  %v1129 = vmul.f32 %v1125, 0.01
  %v1130 = vsel %vm1128, %v1125, %v1129
  %v1131 = vld [vmem:[%s10] sm:$0xf]
  %v1133 = vsel %vm1050, %v1130, 0
  %v1136 = vsel %vm1054, %v1131, 0
  %1138 = vmatprep.subr.mxu0 0.0
  %1139 = vmatpush1.msra.mxu0 0.0
  %1140 = vmatprep.subr.mxu0 0.0
  %1141 = vmatpush1.msra.mxu0 0.0
  %1142 = vmatprep.subr.mxu0 0.0
  %1143 = vmatpush1.msra.mxu0 0.0
  %1144 = vmatprep.subr.mxu0 0.0
  %1145 = vmatpush1.msra.mxu0 0.0
  %1146 = vmatprep.subr.mxu0 0.0
  %1147 = vmatpush1.msra.mxu0 0.0
  %1148 = vmatprep.subr.mxu0 0.0
  %1149 = vmatpush1.msra.mxu0 0.0
  %1150 = vmatprep.subr.mxu0 0.0
  %1151 = vmatpush1.msra.mxu0 0.0
  %1152 = vmatprep.subr.mxu0 0.0
  %1153 = vmatpush1.msra.mxu0 0.0
  %1154 = vmatprep.subr.mxu0 0.0
  %1155 = vmatpush1.msra.mxu0 0.0
  %1156 = vmatprep.subr.mxu0 0.0
  %1157 = vmatpush1.msra.mxu0 0.0
  %1158 = vmatprep.subr.mxu0 0.0
  %1159 = vmatpush1.msra.mxu0 0.0
  %1160 = vmatprep.subr.mxu0 0.0
  %1161 = vmatpush1.msra.mxu0 0.0
  %1162 = vmatprep.subr.mxu0 0.0
  %1163 = vmatpush1.msra.mxu0 0.0
  %1164 = vmatprep.subr.mxu0 0.0
  %1165 = vmatpush1.msra.mxu0 0.0
  %1166 = vmatprep.subr.mxu0 0.0
  %1167 = vmatpush1.msra.mxu0 0.0
  %1168 = vmatprep.subr.mxu0 0.0
  %1169 = vmatpush1.msra.mxu0 %v1136
  %1170 = vmatprep.subr.mxu0 0.0
  %1171 = vmatpush2.msra.mxu0 0.0
  %1172 = vmatprep.subr.mxu0 0.0
  %1173 = vmatpush2.msra.mxu0 0.0
  %1174 = vmatprep.subr.mxu0 0.0
  %1175 = vmatpush2.msra.mxu0 0.0
  %1176 = vmatprep.subr.mxu0 0.0
  %1177 = vmatpush2.msra.mxu0 0.0
  %1178 = vmatprep.subr.mxu0 0.0
  %1179 = vmatpush2.msra.mxu0 0.0
  %1180 = vmatprep.subr.mxu0 0.0
  %1181 = vmatpush2.msra.mxu0 0.0
  %1182 = vmatprep.subr.mxu0 0.0
  %1183 = vmatpush2.msra.mxu0 0.0
  %1184 = vmatprep.subr.mxu0 0.0
  %1185 = vmatpush2.msra.mxu0 0.0
  %1186 = vmatprep.subr.mxu0 0.0
  %1187 = vmatpush2.msra.mxu0 0.0
  %1188 = vmatprep.subr.mxu0 0.0
  %1189 = vmatpush2.msra.mxu0 0.0
  %1190 = vmatprep.subr.mxu0 0.0
  %1191 = vmatpush2.msra.mxu0 0.0
  %1192 = vmatprep.subr.mxu0 0.0
  %1193 = vmatpush2.msra.mxu0 0.0
  %1194 = vmatprep.subr.mxu0 0.0
  %1195 = vmatpush2.msra.mxu0 0.0
  %1196 = vmatprep.subr.mxu0 0.0
  %1197 = vmatpush2.msra.mxu0 0.0
  %1198 = vmatprep.subr.mxu0 0.0
  %1199 = vmatpush2.msra.mxu0 0.0
  %1200 = vmatprep.subr.mxu0 0.0
  %1201 = vmatpush2.msra.mxu0 0.0
  %1202 = vmatprep.mubr.f32.mxu0 0.0
  %1203 = vmatmul.mubr.f32.gmra.mxu0 %v1133
  %v1204 = vpop.f32.mrf.mxu0
  %v1205 = vadd.f32 0.0, %v1204
  %v1206 = vpop.f32.mrf.mxu0
  %1207 = vdwg.mxu0
  %vm1208 = vcmp.gt.f32.partialorder %v1205, 0.0
  %v1209 = vmul.f32 %v1205, 0.01
  %v1210 = vsel %vm1208, %v1205, %v1209
  %v1211 = vld [vmem:[%s8] sm:$0xf]
  %v1213 = vsel %vm1050, %v1210, 0
  %v1216 = vsel %vm1054, %v1211, 0
  %1218 = vmatprep.subr.mxu0 0.0
  %1219 = vmatpush1.msra.mxu0 0.0
  %1220 = vmatprep.subr.mxu0 0.0
  %1221 = vmatpush1.msra.mxu0 0.0
  %1222 = vmatprep.subr.mxu0 0.0
  %1223 = vmatpush1.msra.mxu0 0.0
  %1224 = vmatprep.subr.mxu0 0.0
  %1225 = vmatpush1.msra.mxu0 0.0
  %1226 = vmatprep.subr.mxu0 0.0
  %1227 = vmatpush1.msra.mxu0 0.0
  %1228 = vmatprep.subr.mxu0 0.0
  %1229 = vmatpush1.msra.mxu0 0.0
  %1230 = vmatprep.subr.mxu0 0.0
  %1231 = vmatpush1.msra.mxu0 0.0
  %1232 = vmatprep.subr.mxu0 0.0
  %1233 = vmatpush1.msra.mxu0 0.0
  %1234 = vmatprep.subr.mxu0 0.0
  %1235 = vmatpush1.msra.mxu0 0.0
  %1236 = vmatprep.subr.mxu0 0.0
  %1237 = vmatpush1.msra.mxu0 0.0
  %1238 = vmatprep.subr.mxu0 0.0
  %1239 = vmatpush1.msra.mxu0 0.0
  %1240 = vmatprep.subr.mxu0 0.0
  %1241 = vmatpush1.msra.mxu0 0.0
  %1242 = vmatprep.subr.mxu0 0.0
  %1243 = vmatpush1.msra.mxu0 0.0
  %1244 = vmatprep.subr.mxu0 0.0
  %1245 = vmatpush1.msra.mxu0 0.0
  %1246 = vmatprep.subr.mxu0 0.0
  %1247 = vmatpush1.msra.mxu0 0.0
  %1248 = vmatprep.subr.mxu0 0.0
  %1249 = vmatpush1.msra.mxu0 %v1216
  %1250 = vmatprep.subr.mxu0 0.0
  %1251 = vmatpush2.msra.mxu0 0.0
  %1252 = vmatprep.subr.mxu0 0.0
  %1253 = vmatpush2.msra.mxu0 0.0
  %1254 = vmatprep.subr.mxu0 0.0
  %1255 = vmatpush2.msra.mxu0 0.0
  %1256 = vmatprep.subr.mxu0 0.0
  %1257 = vmatpush2.msra.mxu0 0.0
  %1258 = vmatprep.subr.mxu0 0.0
  %1259 = vmatpush2.msra.mxu0 0.0
  %1260 = vmatprep.subr.mxu0 0.0
  %1261 = vmatpush2.msra.mxu0 0.0
  %1262 = vmatprep.subr.mxu0 0.0
  %1263 = vmatpush2.msra.mxu0 0.0
  %1264 = vmatprep.subr.mxu0 0.0
  %1265 = vmatpush2.msra.mxu0 0.0
  %1266 = vmatprep.subr.mxu0 0.0
  %1267 = vmatpush2.msra.mxu0 0.0
  %1268 = vmatprep.subr.mxu0 0.0
  %1269 = vmatpush2.msra.mxu0 0.0
  %1270 = vmatprep.subr.mxu0 0.0
  %1271 = vmatpush2.msra.mxu0 0.0
  %1272 = vmatprep.subr.mxu0 0.0
  %1273 = vmatpush2.msra.mxu0 0.0
  %1274 = vmatprep.subr.mxu0 0.0
  %1275 = vmatpush2.msra.mxu0 0.0
  %1276 = vmatprep.subr.mxu0 0.0
  %1277 = vmatpush2.msra.mxu0 0.0
  %1278 = vmatprep.subr.mxu0 0.0
  %1279 = vmatpush2.msra.mxu0 0.0
  %1280 = vmatprep.subr.mxu0 0.0
  %1281 = vmatpush2.msra.mxu0 0.0
  %1282 = vmatprep.mubr.f32.mxu0 0.0
  %1283 = vmatmul.mubr.f32.gmra.mxu0 %v1213
  %v1284 = vpop.f32.mrf.mxu0
  %v1285 = vadd.f32 0.0, %v1284
  %v1286 = vpop.f32.mrf.mxu0
  %1287 = vdwg.mxu0
  %v1290 = vunpack.c.l.s4 1966171168
  %v1291 = vunpack.c.0.s8 %v1290
  %v1292 = vlaneseq
  %v1293 = vshrl.u32 %v1292, 7
  %v1294 = vsub.s32 %v1291, %v1293
  %v1295 = vrot.slane %v1285, %v1294
  %v1296 = vcombine.high %v1295, %v1295
  %v1298 = vunpack.c.l.s4 1966171168
  %v1299 = vunpack.c.0.s8 %v1298
  %v1300 = vlaneseq
  %v1301 = vshrl.u32 %v1300, 7
  %v1302 = vsub.s32 %v1299, %v1301
  %v1303 = vrot.slane %v1295, %v1302
  %v1305 = vunpack.c.l.s4 1966171168
  %v1306 = vunpack.c.0.s8 %v1305
  %v1307 = vlaneseq
  %v1308 = vshrl.u32 %v1307, 7
  %v1309 = vsub.s32 %v1306, %v1308
  %v1310 = vrot.slane %v1296, %v1309
  %v1311 = vlaneseq
  %v1312 = vshrl.u32 %v1311, 7
  %v1313 = vsub.s32 0, %v1312
  %v1314 = vrot.slane %v1303, %v1313
  %v1315 = vlaneseq
  %v1316 = vshrl.u32 %v1315, 7
  %v1317 = vsub.s32 0, %v1316
  %v1318 = vrot.slane %v1310, %v1317
  %v1321 = vmul.f32 %v943, %v1314
  %v1322 = vmul.f32 %v944, %v1318
  %v1323 = vadd.f32 %v1321, %v38
  %v1324 = vadd.f32 %v1322, %v39
  %1325 = vst [vmem:[%s11] sm:$0xff] %v1323
  %1326 = vst [vmem:[%s11 + $0x8] sm:$0xff] %v1324
  // Predicated region
  $region46: #{rb_forward_nchw.1} parent=0 // pred_check
    _
  $region47: #{rb_forward_nchw.1} parent=0 // pred_check_branch
    %1328 = sbr.rel (0) target = $region49
  $region48: #{rb_forward_nchw.1} parent=0 // pred_region
    _
  $region49: #{rb_forward_nchw.1} parent=0 // pred_fallthru
    _
  // Predicated region
  $region50: #{rb_forward_nchw.1} parent=0 // pred_check
    _
  $region51: #{rb_forward_nchw.1} parent=0 // pred_check_branch
    %1330 = sbr.rel (0) target = $region53
  $region52: #{rb_forward_nchw.1} parent=0 // pred_region
    _
  $region53: #{rb_forward_nchw.1} parent=0 // pred_fallthru
    _

</llo_original>
